<compile_context>
chip_gen: v5e
topology: v5e:2x2
jax: 0.10.0
libtpu: 0.0.40
codegen_flags: <defaults>
</compile_context>

<pallas_src>
import math

import jax
import jax.numpy as jnp
from jax import lax
from jax.experimental import pallas as pl
from jax.experimental.pallas import tpu as pltpu

HIGHEST = lax.Precision.HIGHEST


def _out_size(H, W, K, stride, pad):
    sh, sw = stride
    return (H + 2 * pad - K) // sh + 1, (W + 2 * pad - K) // sw + 1


def _round_up(n, m):
    return ((n + m - 1) // m) * m


# ----------------------------------------------------------------------------
# Kernel 1: conv_offset_mask (only the live 2*K*K offset channels),
# channel-major output (B, 2KK, P_pad) with P on lanes.
# ----------------------------------------------------------------------------
def _make_conv_kernel(Cin, C2, K, stride, Hout, Wout, P_pad):
    sh, sw = stride
    P = Hout * Wout
    KK = K * K

    def kernel(xp_ref, w_ref, b_ref, o_ref, col_ref):
        xp = xp_ref[0]                                     # (Cin, Hp, Wp) f32
        if P_pad > P:                                      # zero lane tail once
            col_ref[:, P:P_pad] = jnp.zeros((KK * Cin, P_pad - P), jnp.float32)
        # im2col into a lane-dense (K*K*Cin, P_pad) scratch, then ONE fused
        # matmul with P on the output lane axis (unmasked stores).
        for kh in range(K):
            for kw in range(K):
                tap = kh * K + kw
                sl = xp[:, kh:kh + (Hout - 1) * sh + 1:sh,
                        kw:kw + (Wout - 1) * sw + 1:sw]     # (Cin, Hout, Wout)
                col_ref[tap * Cin:(tap + 1) * Cin, :P] = sl.reshape(Cin, P)
        col = col_ref[...].astype(jnp.bfloat16)
        out = jnp.dot(w_ref[...], col,                     # bf16 MXU, f32 accum
                      preferred_element_type=jnp.float32)  # (C2, P_pad)
        o_ref[0] = out + b_ref[...]

    return kernel


def conv_offset_pallas(x, w, b, stride, pad):
    """x: (B,Cin,H,W), w: (C2,Cin,K,K), b: (C2,) -> (B, C2, P_pad) channel-major."""
    B, Cin, H, W = x.shape
    C2, _, K, _ = w.shape
    Hout, Wout = _out_size(H, W, K, stride, pad)
    P = Hout * Wout
    P_pad = _round_up(P, 128)
    Hp, Wp = H + 2 * pad, W + 2 * pad

    xp = jnp.pad(x, ((0, 0), (0, 0), (pad, pad), (pad, pad)))       # (B,Cin,Hp,Wp)
    # Static weight repack; in a real module hoist this to layer init.
    w_r = (jnp.transpose(w, (0, 2, 3, 1)).reshape(C2, K * K * Cin)
           .astype(jnp.bfloat16))
    b_r = b.reshape(C2, 1).astype(jnp.float32)

    kernel = _make_conv_kernel(Cin, C2, K, stride, Hout, Wout, P_pad)
    out = pl.pallas_call(
        kernel,
        out_shape=jax.ShapeDtypeStruct((B, C2, P_pad), jnp.float32),
        grid_spec=pltpu.PrefetchScalarGridSpec(
            num_scalar_prefetch=0,
            grid=(B,),
            in_specs=[
                pl.BlockSpec((1, Cin, Hp, Wp), lambda bi: (bi, 0, 0, 0)),
                pl.BlockSpec((C2, K * K * Cin), lambda bi: (0, 0)),
                pl.BlockSpec((C2, 1), lambda bi: (0, 0)),
            ],
            out_specs=pl.BlockSpec((1, C2, P_pad), lambda bi: (bi, 0, 0)),
            scratch_shapes=[pltpu.VMEM((K * K * Cin, P_pad), jnp.float32)],
        ),
        compiler_params=pltpu.CompilerParams(
            dimension_semantics=("parallel",),
            # explicit limit: v5e's default scoped VMEM is only 16 MiB.
            vmem_limit_bytes=32 * 1024 * 1024),
    )(xp, w_r, b_r)
    return out                                                        # (B, C2, P_pad)


# ----------------------------------------------------------------------------
# Kernel 2: deformable conv (torchvision.ops.deform_conv2d, no mask argument).
# Weight contraction is pre-folded into WX so the kernel does ONE big matmul.
# ----------------------------------------------------------------------------
def _make_deform_kernel(K, stride, pad, H, W, Wout, Qp_pad, PT):
    sh, sw = stride
    Wg = W + 2                       # width of the 1-pixel zero-padded gather image
    KK = K * K

    def kernel(off_ref, wx_ref, b_ref, o_ref, s_ref):
        ob = off_ref[0]                                    # (2*K*K, PT)  f32
        p_id = (lax.broadcasted_iota(jnp.int32, (1, PT), 1)
                + pl.program_id(1) * PT)                   # global output pixel id
        ho = (p_id // Wout).astype(jnp.float32)            # (1, PT)
        wo = (p_id % Wout).astype(jnp.float32)
        qid = lax.broadcasted_iota(jnp.int32, (Qp_pad, PT), 0)
        zerob = jnp.zeros((), jnp.bfloat16)

        # TODO(synk): try lax.fori_loop over taps (bounded live ranges) on HW.
        for kh in range(K):
            for kw in range(K):
                tap = kh * K + kw
                dy = ob[2 * tap:2 * tap + 1, :]            # (1, PT) vertical off
                dx = ob[2 * tap + 1:2 * tap + 2, :]        # (1, PT) horizontal off
                sy = ho * sh - pad + kh + dy               # sample coords in the
                sx = wo * sw - pad + kw + dx               # ORIGINAL image frame
                y0 = jnp.floor(sy)
                x0 = jnp.floor(sx)
                ty = sy - y0
                tx = sx - x0
                # torchvision zeroes the whole sample outside (-1,H)x(-1,W); the
                # zero padding of the gather image handles border corners, so one
                # per-sample mask replaces 4 per-corner clip/validity checks.
                valid = ((sy > -1.0) & (sy < float(H)) &
                         (sx > -1.0) & (sx < float(W))).astype(jnp.float32)
                w00 = ((1.0 - ty) * (1.0 - tx) * valid).astype(jnp.bfloat16)
                w01 = ((1.0 - ty) * tx * valid).astype(jnp.bfloat16)
                w10 = (ty * (1.0 - tx) * valid).astype(jnp.bfloat16)
                w11 = (ty * tx * valid).astype(jnp.bfloat16)
                # flat top-left corner index inside the padded gather image
                base = ((jnp.clip(y0, -1.0, float(H - 1)) + 1.0) * Wg +
                        (jnp.clip(x0, -1.0, float(W - 1)) + 1.0)).astype(jnp.int32)
                # One subtraction + 4 compares against constants builds the
                # per-tap bilinear sampling matrix, selects directly in bf16.
                d = qid - base                             # (Qp_pad, PT) int32
                S = jnp.where(d == 0, w00,
                    jnp.where(d == 1, w01,
                    jnp.where(d == Wg, w10,
                    jnp.where(d == Wg + 1, w11, zerob))))
                s_ref[tap * Qp_pad:(tap + 1) * Qp_pad, :] = S

        # ONE fused gather+weight contraction: (Cout, KK*Qp_pad) x (KK*Qp_pad, PT)
        out = jnp.dot(wx_ref[0], s_ref[...], preferred_element_type=jnp.float32)
        o_ref[0] = out + b_ref[...]                        # (Cout, PT) lane-dense

    return kernel


def deform_conv2d_pallas(x, offset_cp, w, b, stride, pad, *, pt=None):
    """x: (B,Cin,H,W), offset_cp: (B, 2*K*K, P_pad) channel-major padded offsets,
    w: (Cout,Cin,K,K), b: (Cout,) -> (B,Cout,Hout,Wout)."""
    B, Cin, H, W = x.shape
    Cout, _, K, _ = w.shape
    KK = K * K
    Hout, Wout = _out_size(H, W, K, stride, pad)
    P = Hout * Wout
    P_pad = _round_up(P, 128)
    assert offset_cp.shape == (B, 2 * KK, P_pad)
    Qp = (H + 2) * (W + 2)
    Qp_pad = _round_up(Qp, 128)

    if pt is None:
        # Largest lane tile (multiple of 128, divides P_pad, <= 512) keeping the
        # bf16 (KK*Qp_pad, pt) gather-matrix scratch within a v7x-safe budget.
        budget = 12 * 1024 * 1024
        cap = max(1, min(4, budget // (KK * Qp_pad * 2 * 128)))
        n128 = P_pad // 128
        d_best = 1
        for d in range(1, n128 + 1):
            if n128 % d == 0 and d <= cap:
                d_best = d
        pt = 128 * d_best
    assert pt % 128 == 0 and P_pad % pt == 0
    n_pt = P_pad // pt

    # 1-pixel zero-padded gather image, flattened + lane-padded.
    xg = jnp.pad(x, ((0, 0), (0, 0), (1, 1), (1, 1))).reshape(B, Cin, Qp)
    xg = jnp.pad(xg, ((0, 0), (0, 0), (0, Qp_pad - Qp)))
    # Fold the conv weights into the gather image once per call:
    # WX[b, o, tap, q] = sum_c W[o, c, tap] * xg[b, c, q]  -> (B, Cout, KK*Qp_pad)
    # so the in-kernel matmul has M = Cout (not Cin) and taps stack along K.
    w_t = w.reshape(Cout, Cin, KK)
    wx = jnp.einsum("ock,bcq->bokq", w_t, xg, precision=HIGHEST)
    wx = wx.reshape(B, Cout, KK * Qp_pad).astype(jnp.bfloat16)
    b_r = b.reshape(Cout, 1).astype(jnp.float32)

    kernel = _make_deform_kernel(K, stride, pad, H, W, Wout, Qp_pad, pt)
    out = pl.pallas_call(
        kernel,
        out_shape=jax.ShapeDtypeStruct((B, Cout, P_pad), jnp.float32),
        grid_spec=pltpu.PrefetchScalarGridSpec(
            num_scalar_prefetch=0,
            grid=(B, n_pt),
            in_specs=[
                pl.BlockSpec((1, 2 * KK, pt), lambda bi, pi: (bi, 0, pi)),
                pl.BlockSpec((1, Cout, KK * Qp_pad), lambda bi, pi: (bi, 0, 0)),
                pl.BlockSpec((Cout, 1), lambda bi, pi: (0, 0)),
            ],
            out_specs=pl.BlockSpec((1, Cout, pt), lambda bi, pi: (bi, 0, pi)),
            scratch_shapes=[pltpu.VMEM((KK * Qp_pad, pt), jnp.bfloat16)],
        ),
        compiler_params=pltpu.CompilerParams(
            dimension_semantics=("parallel", "parallel"),
            vmem_limit_bytes=48 * 1024 * 1024),
    )(offset_cp, wx, b_r)
    return out[:, :, :P].reshape(B, Cout, Hout, Wout)


# ----------------------------------------------------------------------------
# DCNv2.forward
# ----------------------------------------------------------------------------
def dcnv2_forward(x, offset_in, params, K, stride, pad, *, pt=None):
    B, Cin, H, W = x.shape
    Hout, Wout = _out_size(H, W, K, stride, pad)
    P = Hout * Wout
    KK = K * K
    # torch.chunk(out,3) -> cat(o1,o2) == the first 2*K*K channels.  The mask
    # third + sigmoid never reach deform_conv2d, so they are not computed.
    w_off = params["w_offset_mask"][:2 * KK]
    b_off = params["b_offset_mask"][:2 * KK]
    off_pad = conv_offset_pallas(offset_in, w_off, b_off, stride, pad)  # (B,2KK,P_pad)
    offset = off_pad[:, :, :P].reshape(B, 2 * KK, Hout, Wout)
    x_out = deform_conv2d_pallas(x, off_pad, params["weight"], params["bias"],
                                 stride, pad, pt=pt)
    return offset, x_out


# ----------------------------------------------------------------------------
# Pure-JAX references (correctness check only; full f32 / HIGHEST)
# ----------------------------------------------------------------------------
def _conv2d_ref(x, w, b, stride, pad):
    out = lax.conv_general_dilated(
        x, w, window_strides=stride, padding=[(pad, pad), (pad, pad)],
        dimension_numbers=("NCHW", "OIHW", "NCHW"), precision=HIGHEST)
    return out + b[None, :, None, None]


def _deform_conv2d_ref(x, offset, w, b, stride, pad):
    B, Cin, H, W = x.shape
    Cout, _, K, _ = w.shape
    sh, sw = stride
    Hout, Wout = _out_size(H, W, K, stride, pad)
    ho = jnp.arange(Hout, dtype=jnp.float32).reshape(Hout, 1)
    wo = jnp.arange(Wout, dtype=jnp.float32).reshape(1, Wout)
    out = jnp.zeros((B, Cout, Hout, Wout), jnp.float32)
    for p in range(K * K):
        kh, kw = p // K, p % K
        dy = offset[:, 2 * p]
        dx = offset[:, 2 * p + 1]
        y = ho * sh - pad + kh + dy
        xx = wo * sw - pad + kw + dx
        y0 = jnp.floor(y)
        x0 = jnp.floor(xx)
        sampled = jnp.zeros((B, Cin, Hout, Wout), jnp.float32)
        for oy in (0.0, 1.0):
            for ox in (0.0, 1.0):
                cy = y0 + oy
                cx = x0 + ox
                wt = (1.0 - jnp.abs(y - cy)) * (1.0 - jnp.abs(xx - cx))
                valid = (cy >= 0) & (cy <= H - 1) & (cx >= 0) & (cx <= W - 1)
                wt = jnp.where(valid, wt, 0.0)
                cyi = jnp.clip(cy, 0, H - 1).astype(jnp.int32)
                cxi = jnp.clip(cx, 0, W - 1).astype(jnp.int32)
                g = jax.vmap(lambda xb, yi, xi: xb[:, yi, xi])(x, cyi, cxi)
                sampled = sampled + wt[:, None] * g
        out = out + jnp.einsum("oc,bchw->bohw", w[:, :, kh, kw], sampled,
                               precision=HIGHEST)
    return out + b[None, :, None, None]


def _forward_ref(x, offset_in, params, K, stride, pad):
    out = _conv2d_ref(offset_in, params["w_offset_mask"], params["b_offset_mask"],
                      stride, pad)
    KK = K * K
    offset = out[:, :2 * KK]          # == cat(chunk[0], chunk[1])
    x_out = _deform_conv2d_ref(x, offset, params["weight"], params["bias"],
                               stride, pad)
    return offset, x_out


# ----------------------------------------------------------------------------
if __name__ == "__main__":
    B, Cin, Cout, H, W = 2, 4, 8, 16, 16
    K, stride, pad = 3, (1, 1), 1

    key = jax.random.PRNGKey(0)
    k1, k2, k3, k4, k5, k6 = jax.random.split(key, 6)

    # Module shapes (DCNv2.__init__).  The offset-mask conv uses small non-zero
    # weights (instead of the module's zero init) so the deformable sampling
    # path is actually exercised.
    stdv = 1.0 / math.sqrt(Cin * K * K)
    params = {
        "weight": jax.random.uniform(k1, (Cout, Cin, K, K), jnp.float32,
                                     minval=-stdv, maxval=stdv),
        "bias": 0.05 * jax.random.normal(k2, (Cout,), jnp.float32),
        "w_offset_mask": 0.1 * jax.random.normal(k3, (3 * K * K, Cin, K, K),
                                                 jnp.float32),
        "b_offset_mask": 0.1 * jax.random.normal(k4, (3 * K * K,), jnp.float32),
    }

    x = jax.random.normal(k5, (B, Cin, H, W), jnp.float32)
    offset_in = jax.random.normal(k6, (B, Cin, H, W), jnp.float32)

    # pt=128 exercises the tiled 'parallel' spatial grid axis (2 tiles/batch).
    offset_k, xout_k = dcnv2_forward(x, offset_in, params, K, stride, pad, pt=128)
    jax.block_until_ready((offset_k, xout_k))

    offset_r, xout_r = _forward_ref(x, offset_in, params, K, stride, pad)
    assert offset_k.shape == (B, 2 * K * K, H, W)
    assert xout_k.shape == (B, Cout, H, W)
    # Kernels feed the MXU bf16 (f32 accumulation); compare at bf16-appropriate
    # tolerances against the f32/HIGHEST reference.
    assert jnp.allclose(offset_k, offset_r, atol=1e-2, rtol=1e-2), "offset mismatch"
    assert jnp.allclose(xout_k, xout_r, atol=2e-2, rtol=2e-2), "deform-conv mismatch"

    print("KERNEL_OK")
</pallas_src>

<mosaic_0001>
module attributes {stable_mosaic.version = 11 : i64} {
  func.func @kernel(%arg0: i32, %arg1: memref<1x4x18x18xf32, #tpu.memory_space<vmem>>, %arg2: memref<18x36xbf16, #tpu.memory_space<vmem>>, %arg3: memref<18x1xf32, #tpu.memory_space<vmem>>, %arg4: memref<1x18x256xf32, #tpu.memory_space<vmem>>, %arg5: memref<36x256xf32, #tpu.memory_space<vmem>>) attributes {dimension_semantics = [#tpu.dimension_semantics<parallel>], iteration_bounds = array<i64: 2>, scalar_prefetch = 0 : i64, scratch_operands = 1 : i64, tpu.core_type = #tpu.core_type<tc>, window_params = [{transform_indices = @transform_0, window_bounds = array<i64: 1, 4, 18, 18>}, {pipeline_mode = #tpu.pipeline_mode<synchronous>, transform_indices = @transform_1, window_bounds = array<i64: 18, 36>}, {pipeline_mode = #tpu.pipeline_mode<synchronous>, transform_indices = @transform_2, window_bounds = array<i64: 18, 1>}, {transform_indices = @transform_3, window_bounds = array<i64: 1, 18, 256>}]} {
    %c0 = arith.constant 0 : index
    %c0_0 = arith.constant 0 : index
    %c0_1 = arith.constant 0 : index
    %c0_2 = arith.constant 0 : index
    %0 = vector.load %arg1[%c0, %c0_0, %c0_1, %c0_2] : memref<1x4x18x18xf32, #tpu.memory_space<vmem>>, vector<1x4x18x18xf32>
    %1 = vector.shape_cast %0 : vector<1x4x18x18xf32> to vector<4x18x18xf32>
    %2 = vector.extract_strided_slice %1 {offsets = [0, 0, 0], sizes = [4, 16, 16], strides = [1, 1, 1]} : vector<4x18x18xf32> to vector<4x16x16xf32>
    %3 = vector.shape_cast %2 : vector<4x16x16xf32> to vector<4x256xf32>
    %c0_3 = arith.constant 0 : index
    %c0_4 = arith.constant 0 : index
    %4 = vector.load %arg5[%c0_3, %c0_4] : memref<36x256xf32, #tpu.memory_space<vmem>>, vector<4x256xf32>
    tpu.vector_store %arg5[%c0_3, %c0_4], %3 {strides = array<i32>} : memref<36x256xf32, #tpu.memory_space<vmem>>, vector<4x256xf32>,
    %5 = vector.extract_strided_slice %1 {offsets = [0, 0, 1], sizes = [4, 16, 16], strides = [1, 1, 1]} : vector<4x18x18xf32> to vector<4x16x16xf32>
    %6 = vector.shape_cast %5 : vector<4x16x16xf32> to vector<4x256xf32>
    %c4 = arith.constant 4 : index
    %c0_5 = arith.constant 0 : index
    %7 = vector.load %arg5[%c4, %c0_5] : memref<36x256xf32, #tpu.memory_space<vmem>>, vector<4x256xf32>
    tpu.vector_store %arg5[%c4, %c0_5], %6 {strides = array<i32>} : memref<36x256xf32, #tpu.memory_space<vmem>>, vector<4x256xf32>,
    %8 = vector.extract_strided_slice %1 {offsets = [0, 0, 2], sizes = [4, 16, 16], strides = [1, 1, 1]} : vector<4x18x18xf32> to vector<4x16x16xf32>
    %9 = vector.shape_cast %8 : vector<4x16x16xf32> to vector<4x256xf32>
    %c8 = arith.constant 8 : index
    %c0_6 = arith.constant 0 : index
    %10 = vector.load %arg5[%c8, %c0_6] : memref<36x256xf32, #tpu.memory_space<vmem>>, vector<4x256xf32>
    tpu.vector_store %arg5[%c8, %c0_6], %9 {strides = array<i32>} : memref<36x256xf32, #tpu.memory_space<vmem>>, vector<4x256xf32>,
    %11 = vector.extract_strided_slice %1 {offsets = [0, 1, 0], sizes = [4, 16, 16], strides = [1, 1, 1]} : vector<4x18x18xf32> to vector<4x16x16xf32>
    %12 = vector.shape_cast %11 : vector<4x16x16xf32> to vector<4x256xf32>
    %c12 = arith.constant 12 : index
    %c0_7 = arith.constant 0 : index
    %13 = vector.load %arg5[%c12, %c0_7] : memref<36x256xf32, #tpu.memory_space<vmem>>, vector<4x256xf32>
    tpu.vector_store %arg5[%c12, %c0_7], %12 {strides = array<i32>} : memref<36x256xf32, #tpu.memory_space<vmem>>, vector<4x256xf32>,
    %14 = vector.extract_strided_slice %1 {offsets = [0, 1, 1], sizes = [4, 16, 16], strides = [1, 1, 1]} : vector<4x18x18xf32> to vector<4x16x16xf32>
    %15 = vector.shape_cast %14 : vector<4x16x16xf32> to vector<4x256xf32>
    %c16 = arith.constant 16 : index
    %c0_8 = arith.constant 0 : index
    %16 = vector.load %arg5[%c16, %c0_8] : memref<36x256xf32, #tpu.memory_space<vmem>>, vector<4x256xf32>
    tpu.vector_store %arg5[%c16, %c0_8], %15 {strides = array<i32>} : memref<36x256xf32, #tpu.memory_space<vmem>>, vector<4x256xf32>,
    %17 = vector.extract_strided_slice %1 {offsets = [0, 1, 2], sizes = [4, 16, 16], strides = [1, 1, 1]} : vector<4x18x18xf32> to vector<4x16x16xf32>
    %18 = vector.shape_cast %17 : vector<4x16x16xf32> to vector<4x256xf32>
    %c20 = arith.constant 20 : index
    %c0_9 = arith.constant 0 : index
    %19 = vector.load %arg5[%c20, %c0_9] : memref<36x256xf32, #tpu.memory_space<vmem>>, vector<4x256xf32>
    tpu.vector_store %arg5[%c20, %c0_9], %18 {strides = array<i32>} : memref<36x256xf32, #tpu.memory_space<vmem>>, vector<4x256xf32>,
    %20 = vector.extract_strided_slice %1 {offsets = [0, 2, 0], sizes = [4, 16, 16], strides = [1, 1, 1]} : vector<4x18x18xf32> to vector<4x16x16xf32>
    %21 = vector.shape_cast %20 : vector<4x16x16xf32> to vector<4x256xf32>
    %c24 = arith.constant 24 : index
    %c0_10 = arith.constant 0 : index
    %22 = vector.load %arg5[%c24, %c0_10] : memref<36x256xf32, #tpu.memory_space<vmem>>, vector<4x256xf32>
    tpu.vector_store %arg5[%c24, %c0_10], %21 {strides = array<i32>} : memref<36x256xf32, #tpu.memory_space<vmem>>, vector<4x256xf32>,
    %23 = vector.extract_strided_slice %1 {offsets = [0, 2, 1], sizes = [4, 16, 16], strides = [1, 1, 1]} : vector<4x18x18xf32> to vector<4x16x16xf32>
    %24 = vector.shape_cast %23 : vector<4x16x16xf32> to vector<4x256xf32>
    %c28 = arith.constant 28 : index
    %c0_11 = arith.constant 0 : index
    %25 = vector.load %arg5[%c28, %c0_11] : memref<36x256xf32, #tpu.memory_space<vmem>>, vector<4x256xf32>
    tpu.vector_store %arg5[%c28, %c0_11], %24 {strides = array<i32>} : memref<36x256xf32, #tpu.memory_space<vmem>>, vector<4x256xf32>,
    %26 = vector.extract_strided_slice %1 {offsets = [0, 2, 2], sizes = [4, 16, 16], strides = [1, 1, 1]} : vector<4x18x18xf32> to vector<4x16x16xf32>
    %27 = vector.shape_cast %26 : vector<4x16x16xf32> to vector<4x256xf32>
    %c32 = arith.constant 32 : index
    %c0_12 = arith.constant 0 : index
    %28 = vector.load %arg5[%c32, %c0_12] : memref<36x256xf32, #tpu.memory_space<vmem>>, vector<4x256xf32>
    tpu.vector_store %arg5[%c32, %c0_12], %27 {strides = array<i32>} : memref<36x256xf32, #tpu.memory_space<vmem>>, vector<4x256xf32>,
    %c0_13 = arith.constant 0 : index
    %c0_14 = arith.constant 0 : index
    %29 = vector.load %arg5[%c0_13, %c0_14] : memref<36x256xf32, #tpu.memory_space<vmem>>, vector<36x256xf32>
    %30 = arith.truncf %29 : vector<36x256xf32> to vector<36x256xbf16>
    %c0_15 = arith.constant 0 : index
    %c0_16 = arith.constant 0 : index
    %31 = vector.load %arg2[%c0_15, %c0_16] : memref<18x36xbf16, #tpu.memory_space<vmem>>, vector<18x36xbf16>
    %cst = arith.constant dense<0.000000e+00> : vector<18x256xf32>
    %32 = tpu.matmul %31, %30, %cst {dimension_numbers = #tpu.dot_dimension_numbers<[1], [0], [0], [1], [0, 0, 1, 1], [], []>} : vector<18x36xbf16>, vector<36x256xbf16>, vector<18x256xf32> -> vector<18x256xf32>
    %c0_17 = arith.constant 0 : index
    %c0_18 = arith.constant 0 : index
    %33 = vector.load %arg3[%c0_17, %c0_18] : memref<18x1xf32, #tpu.memory_space<vmem>>, vector<18x1xf32>
    %34 = vector.broadcast %33 : vector<18x1xf32> to vector<18x256xf32>
    %35 = arith.addf %32, %34 : vector<18x256xf32>
    %c0_19 = arith.constant 0 : index
    %c0_20 = arith.constant 0 : index
    %c0_21 = arith.constant 0 : index
    %36 = vector.load %arg4[%c0_19, %c0_20, %c0_21] : memref<1x18x256xf32, #tpu.memory_space<vmem>>, vector<1x18x256xf32>
    %37 = vector.shape_cast %36 : vector<1x18x256xf32> to vector<18x256xf32>
    %38 = vector.shape_cast %35 : vector<18x256xf32> to vector<1x18x256xf32>
    tpu.vector_store %arg4[%c0_19, %c0_20, %c0_21], %38 {strides = array<i32>} : memref<1x18x256xf32, #tpu.memory_space<vmem>>, vector<1x18x256xf32>,
    return
  }
  func.func @transform_0(%arg0: i32) -> (i32, i32, i32, i32) {
    %c0_i32 = arith.constant 0 : i32
    %c0_i32_0 = arith.constant 0 : i32
    %c0_i32_1 = arith.constant 0 : i32
    %c0_i32_2 = arith.constant 0 : i32
    return %arg0, %c0_i32, %c0_i32_0, %c0_i32_1 : i32, i32, i32, i32
  }
  func.func @transform_1(%arg0: i32) -> (i32, i32) {
    %c0_i32 = arith.constant 0 : i32
    %c0_i32_0 = arith.constant 0 : i32
    %c0_i32_1 = arith.constant 0 : i32
    return %c0_i32, %c0_i32_0 : i32, i32
  }
  func.func @transform_2(%arg0: i32) -> (i32, i32) {
    %c0_i32 = arith.constant 0 : i32
    %c0_i32_0 = arith.constant 0 : i32
    %c0_i32_1 = arith.constant 0 : i32
    return %c0_i32, %c0_i32_0 : i32, i32
  }
  func.func @transform_3(%arg0: i32) -> (i32, i32, i32) {
    %c0_i32 = arith.constant 0 : i32
    %c0_i32_0 = arith.constant 0 : i32
    %c0_i32_1 = arith.constant 0 : i32
    return %arg0, %c0_i32, %c0_i32_0 : i32, i32, i32
  }
}

</mosaic_0001>

<llo_original>
// kernel: tpu_custom_call.1
$region0: #{tpu_custom_call.1}
  #allocation0 [shape = 'u32[]', space=smem, size = 0x4, offset = 0x4, fixed_abs, tag = 'smem constant byte address 0x4 - core index']
  #allocation1 [shape = 'u32[72,128]{1,0:T(1,128)}', space=vmem, size = 0x9000, scoped, tag = 'internal scratch']
  #allocation2 [shape = 'f32[36,256]{1,0:T(8,128)}', space=vmem, size = 0xa000, scoped, tag = 'scratch operand']
  %s0 = inlined_call_operand.vmem [shape: f32[2,4,18,18], index: 0, kind: input, shape index: {}]
  %s1 = inlined_call_operand.vmem [shape: bf16[18,36], index: 1, kind: input, shape index: {}]
  %s2 = inlined_call_operand.vmem [shape: f32[18,1], index: 2, kind: input, shape index: {}]
  %s3 = inlined_call_operand.vmem [shape: f32[2,18,256], index: 3, kind: output, shape index: {}]
  %s4 = sld [smem:[#allocation0]]
  $region45: #{tpu_custom_call.1} parent=0
    _
  %s6 = ssub.s32 1, %s4
  %s7 = scalar_select 0, %s6, %s4
  loop: start=0, step=1, limit=4
  $region2: #{tpu_custom_call.1} parent=0 // loop_pre_header
    _
  $region3: #{tpu_custom_call.1} parent=0 // loop_header
    %s9 = sphi 0, %s13
    %p10 = scmp.ge.s32.totalorder %s9, 4
    %s19 = sphi 0, %s21
    %s22 = sphi 0, %s19
    %s23 = sphi 0, %s22
    %s39 = sphi 0, %s23
    %s43 = sphi 0, %s43
    %s45 = sphi 0, %s43
    %s46 = sphi 0, %s45
    %s60 = sphi 0, %s46
    %s64 = sphi 0, %s64
    %s66 = sphi 0, %s64
    %s67 = sphi 0, %s66
    %s81 = sphi 0, %s67
    %s87 = sphi 0, %s89
    %s90 = sphi 0, %s87
    %s91 = sphi 0, %s90
    %s107 = sphi 0, %s91
  $region4: #{tpu_custom_call.1} parent=0 // loop_header_branch
    %12 = sbr.rel (%p10) target = $region8
  $region5: #{tpu_custom_call.1} parent=0 // loop_body
    %s14 = ssub.s32 %s9, 1
    %s15 = ssub.s32 %s9, 2
    %s16 = sadd.s32 %s9, 1
    %s17 = ssub.s32 %s9, %s16
    %p18 = scmp.eq.s32.totalorder %s17, 0
    %s20 = sadd.s32 %s19, 1
    %s21 = scalar_select %p18, %s19, %s20
    %p24 = pneg %p18
    %p25 = scmp.eq.s32.totalorder %s9, 1
    %p26 = por %p24, %p25
    %p27 = scmp.ne.s32.totalorder %s19, %s22
    %p28 = scmp.eq.s32.totalorder %s9, 0
    %p29 = por %p27, %p28
    %p30 = scmp.ne.s32.totalorder %s19, %s22
    %p31 = scmp.eq.s32.totalorder %s14, 1
    %p32 = por %p30, %p31
    %p33 = scmp.ne.s32.totalorder %s22, %s23
    %p34 = scmp.eq.s32.totalorder %s14, 0
    %p35 = por %p33, %p34
    %p36 = scmp.ne.s32.totalorder %s22, %s23
    %p37 = scmp.eq.s32.totalorder %s15, 1
    %p38 = por %p36, %p37
    %p40 = scmp.ne.s32.totalorder %s23, %s39
    %p41 = scmp.eq.s32.totalorder %s15, 0
    %p42 = por %p40, %p41
    %s44 = sadd.s32 %s43, 1
    %p47 = scmp.eq.s32.totalorder %s9, 1
    %p48 = scmp.ne.s32.totalorder %s43, %s45
    %p49 = scmp.eq.s32.totalorder %s9, 0
    %p50 = por %p48, %p49
    %p51 = scmp.ne.s32.totalorder %s43, %s45
    %p52 = scmp.eq.s32.totalorder %s14, 1
    %p53 = por %p51, %p52
    %p54 = scmp.ne.s32.totalorder %s45, %s46
    %p55 = scmp.eq.s32.totalorder %s14, 0
    %p56 = por %p54, %p55
    %p57 = scmp.ne.s32.totalorder %s45, %s46
    %p58 = scmp.eq.s32.totalorder %s15, 1
    %p59 = por %p57, %p58
    %p61 = scmp.ne.s32.totalorder %s46, %s60
    %p62 = scmp.eq.s32.totalorder %s15, 0
    %p63 = por %p61, %p62
    %s65 = sadd.s32 %s64, 1
    %p68 = scmp.eq.s32.totalorder %s9, 1
    %p69 = scmp.ne.s32.totalorder %s64, %s66
    %p70 = scmp.eq.s32.totalorder %s9, 0
    %p71 = por %p69, %p70
    %p72 = scmp.ne.s32.totalorder %s64, %s66
    %p73 = scmp.eq.s32.totalorder %s14, 1
    %p74 = por %p72, %p73
    %p75 = scmp.ne.s32.totalorder %s66, %s67
    %p76 = scmp.eq.s32.totalorder %s14, 0
    %p77 = por %p75, %p76
    %p78 = scmp.ne.s32.totalorder %s66, %s67
    %p79 = scmp.eq.s32.totalorder %s15, 1
    %p80 = por %p78, %p79
    %p82 = scmp.ne.s32.totalorder %s67, %s81
    %p83 = scmp.eq.s32.totalorder %s15, 0
    %p84 = por %p82, %p83
    %s85 = ssub.s32 %s9, %s16
    %p86 = scmp.eq.s32.totalorder %s85, 0
    %s88 = sadd.s32 %s87, 1
    %s89 = scalar_select %p86, %s87, %s88
    %p92 = pneg %p86
    %p93 = scmp.eq.s32.totalorder %s9, 1
    %p94 = por %p92, %p93
    %p95 = scmp.ne.s32.totalorder %s87, %s90
    %p96 = scmp.eq.s32.totalorder %s9, 0
    %p97 = por %p95, %p96
    %p98 = scmp.ne.s32.totalorder %s87, %s90
    %p99 = scmp.eq.s32.totalorder %s14, 1
    %p100 = por %p98, %p99
    %p101 = scmp.ne.s32.totalorder %s90, %s91
    %p102 = scmp.eq.s32.totalorder %s14, 0
    %p103 = por %p101, %p102
    %p104 = scmp.ne.s32.totalorder %s90, %s91
    %p105 = scmp.eq.s32.totalorder %s15, 1
    %p106 = por %p104, %p105
    %p108 = scmp.ne.s32.totalorder %s91, %s107
    %p109 = scmp.eq.s32.totalorder %s15, 0
    %p110 = por %p108, %p109
    %p111 = scmp.le.s32.totalorder 1, %s9
    %p112 = scmp.lt.s32.totalorder %s9, 3
    %p113 = pnand %p111, %p112
    %p114 = pneg %p113
    // Predicated region
    $region9: #{tpu_custom_call.1} parent=5 // pred_check
      _
    $region10: #{tpu_custom_call.1} parent=5 // pred_check_branch
      %116 = sbr.rel (%p113) target = $region12
    $region11: #{tpu_custom_call.1} parent=5 // pred_region
      %s117 = ssub.s32 %s9, 1
      // Predicated region
      $region13: #{tpu_custom_call.1} parent=11 // pred_check
        %p118 = pneg %p56
      $region14: #{tpu_custom_call.1} parent=11 // pred_check_branch
        %120 = sbr.rel (%p118) target = $region16
      $region15: #{tpu_custom_call.1} parent=11 // pred_region
        _
      $region16: #{tpu_custom_call.1} parent=11 // pred_fallthru
        _
      // Predicated region
      $region17: #{tpu_custom_call.1} parent=11 // pred_check
        %p121 = pneg %p77
      $region18: #{tpu_custom_call.1} parent=11 // pred_check_branch
        %123 = sbr.rel (%p121) target = $region20
      $region19: #{tpu_custom_call.1} parent=11 // pred_region
        _
      $region20: #{tpu_custom_call.1} parent=11 // pred_fallthru
        _
    $region12: #{tpu_custom_call.1} parent=5 // pred_fallthru
      _
    %p124 = scmp.lt.s32.totalorder %s9, 2
    // Predicated region
    $region21: #{tpu_custom_call.1} parent=5 // pred_check
      %p125 = pneg %p124
    $region22: #{tpu_custom_call.1} parent=5 // pred_check_branch
      %127 = sbr.rel (%p125) target = $region24
    $region23: #{tpu_custom_call.1} parent=5 // pred_region
      // Predicated region
      $region25: #{tpu_custom_call.1} parent=23 // pred_check
        %p128 = pneg %p29
      $region26: #{tpu_custom_call.1} parent=23 // pred_check_branch
        %130 = sbr.rel (%p128) target = $region28
      $region27: #{tpu_custom_call.1} parent=23 // pred_region
        %p131 = scmp.lt.s32.totalorder %s9, 1
        %s132 = scalar_select %p131, %s9, 1
        %s133 = smul.addr %s132, 12
        %s134 = smul.addr %s133, 8
        %s135 = scalar_lea.vmem %s0, %s134
      $region28: #{tpu_custom_call.1} parent=23 // pred_fallthru
        _
    $region24: #{tpu_custom_call.1} parent=5 // pred_fallthru
      _
    %p136 = scmp.le.s32.totalorder 1, %s9
    %p137 = scmp.lt.s32.totalorder %s9, 3
    %p138 = pnand %p136, %p137
    %p139 = pneg %p138
    // Predicated region
    $region29: #{tpu_custom_call.1} parent=5 // pred_check
      _
    $region30: #{tpu_custom_call.1} parent=5 // pred_check_branch
      %141 = sbr.rel (%p138) target = $region32
    $region31: #{tpu_custom_call.1} parent=5 // pred_region
      %s142 = ssub.s32 %s9, 1
      %p143 = scmp.lt.s32.totalorder %s14, 1
      %s144 = scalar_select %p143, %s14, 1
      %s145 = smul.addr %s144, 12
      %s146 = smul.addr %s145, 8
      %s147 = scalar_lea.vmem %s0, %s146
      %p148 = pneg %p35
      %p149 = pneg %p32
      %p150 = pneg %p56
      %p151 = pneg %p53
      %p152 = pneg %p77
      %p153 = pneg %p74
      %p154 = pneg %p103
      %p155 = pneg %p100
      %p156 = scmp.lt.s32.totalorder %s14, 1
      %s157 = scalar_select %p156, %s14, 1
      %s158 = smul.addr %s157, 6
      %s159 = smul.addr %s158, 8
      %s160 = scalar_lea.vmem %s3, %s159
      %p161 = scmp.lt.s32.totalorder %s14, 1
      %s162 = scalar_select %p161, %s14, 1
      %s163 = smul.addr %s162, 12
      %s164 = smul.addr %s163, 8
      %s165 = scalar_lea.vmem %s0, %s164
      %p166 = scmp.lt.s32.totalorder %s14, 1
      %s167 = scalar_select %p166, %s14, 1
      %s168 = smul.addr %s167, 6
      %s169 = smul.addr %s168, 8
      %s170 = scalar_lea.vmem %s3, %s169
      %v172 = vld [vmem:[%s165] sm:$0xff]
      %v173 = vld [vmem:[%s165 + $0x8] sm:$0xff]
      %v174 = vld [vmem:[%s165 + $0x10] sm:$0x3]
      %v175 = vld [vmem:[%s165 + $0x18] sm:$0xff]
      %v176 = vld [vmem:[%s165 + $0x20] sm:$0xff]
      %v177 = vld [vmem:[%s165 + $0x28] sm:$0x3]
      %v178 = vld [vmem:[%s165 + $0x30] sm:$0xff]
      %v179 = vld [vmem:[%s165 + $0x38] sm:$0xff]
      %v180 = vld [vmem:[%s165 + $0x40] sm:$0x3]
      %v181 = vld [vmem:[%s165 + $0x48] sm:$0xff]
      %v182 = vld [vmem:[%s165 + $0x50] sm:$0xff]
      %v183 = vld [vmem:[%s165 + $0x58] sm:$0x3]
      %v184 = vrot.slane %v178, 4
      %vm185 = vcmask 1047556
      %v186 = vsel %vm185, %v184, %v172
      %v187 = vrot.slane %v172, 4
      %v188 = vsel %vm185, %v178, %v187
      %v190 = vunpack.c.l.s4 1983009808
      %v191 = vunpack.c.0.s8 %v190
      %v192 = vperm.slane %v186, %v191
      %v194 = vunpack.c.l.s4 1983009808
      %v195 = vunpack.c.0.s8 %v194
      %v196 = vperm.slane %v188, %v195
      %v197 = vrot.slane %v181, 4
      %v198 = vsel %vm185, %v197, %v175
      %v199 = vrot.slane %v175, 4
      %v200 = vsel %vm185, %v181, %v199
      %v202 = vunpack.c.l.s4 1983009808
      %v203 = vunpack.c.0.s8 %v202
      %v204 = vperm.slane %v198, %v203
      %v206 = vunpack.c.l.s4 1983009808
      %v207 = vunpack.c.0.s8 %v206
      %v208 = vperm.slane %v200, %v207
      %v209 = vrot.slane %v204, 4
      %v210 = vsel %vm185, %v209, %v192
      %v211 = vrot.slane %v192, 4
      %v212 = vsel %vm185, %v204, %v211
      %v214 = vunpack.c.l.s4 1934713408
      %v215 = vunpack.c.0.s8 %v214
      %v216 = vperm.slane %v210, %v215
      %v218 = vunpack.c.l.s4 1934713408
      %v219 = vunpack.c.0.s8 %v218
      %v220 = vperm.slane %v212, %v219
      %v221 = vrot.slane %v208, 4
      %v222 = vsel %vm185, %v221, %v196
      %v223 = vrot.slane %v196, 4
      %v224 = vsel %vm185, %v208, %v223
      %v226 = vunpack.c.l.s4 1934713408
      %v227 = vunpack.c.0.s8 %v226
      %v228 = vperm.slane %v222, %v227
      %v230 = vunpack.c.l.s4 1934713408
      %v231 = vunpack.c.0.s8 %v230
      %v232 = vperm.slane %v224, %v231
      %v233 = vrot.slane %v216, 4
      %v234 = vsel %vm185, 0.0, %v233
      %v235 = vrot.slane %v220, 4
      %v236 = vsel %vm185, 0.0, %v235
      %v237 = vrot.slane %v228, 4
      %v238 = vsel %vm185, 0.0, %v237
      %v239 = vrot.slane %v232, 4
      %v240 = vsel %vm185, 0.0, %v239
      %v241 = vrot.slane %v179, 4
      %v242 = vsel %vm185, %v241, %v173
      %v243 = vrot.slane %v173, 4
      %v244 = vsel %vm185, %v179, %v243
      %v246 = vunpack.c.l.s4 1983009808
      %v247 = vunpack.c.0.s8 %v246
      %v248 = vperm.slane %v242, %v247
      %v250 = vunpack.c.l.s4 1983009808
      %v251 = vunpack.c.0.s8 %v250
      %v252 = vperm.slane %v244, %v251
      %v253 = vrot.slane %v182, 4
      %v254 = vsel %vm185, %v253, %v176
      %v255 = vrot.slane %v176, 4
      %v256 = vsel %vm185, %v182, %v255
      %v258 = vunpack.c.l.s4 1983009808
      %v259 = vunpack.c.0.s8 %v258
      %v260 = vperm.slane %v254, %v259
      %v262 = vunpack.c.l.s4 1983009808
      %v263 = vunpack.c.0.s8 %v262
      %v264 = vperm.slane %v256, %v263
      %v265 = vrot.slane %v260, 4
      %v266 = vsel %vm185, %v265, %v248
      %v267 = vrot.slane %v248, 4
      %v268 = vsel %vm185, %v260, %v267
      %v270 = vunpack.c.l.s4 1934713408
      %v271 = vunpack.c.0.s8 %v270
      %v272 = vperm.slane %v266, %v271
      %v274 = vunpack.c.l.s4 1934713408
      %v275 = vunpack.c.0.s8 %v274
      %v276 = vperm.slane %v268, %v275
      %v277 = vrot.slane %v264, 4
      %v278 = vsel %vm185, %v277, %v252
      %v279 = vrot.slane %v252, 4
      %v280 = vsel %vm185, %v264, %v279
      %v282 = vunpack.c.l.s4 1934713408
      %v283 = vunpack.c.0.s8 %v282
      %v284 = vperm.slane %v278, %v283
      %v286 = vunpack.c.l.s4 1934713408
      %v287 = vunpack.c.0.s8 %v286
      %v288 = vperm.slane %v280, %v287
      %v289 = vrot.slane %v272, 4
      %v290 = vsel %vm185, 0.0, %v289
      %v291 = vrot.slane %v276, 4
      %v292 = vsel %vm185, 0.0, %v291
      %v293 = vrot.slane %v284, 4
      %v294 = vsel %vm185, 0.0, %v293
      %v295 = vrot.slane %v288, 4
      %v296 = vsel %vm185, 0.0, %v295
      %298 = vrot.lane.b32.xlu0 %v234, 16
      %v299 = vpop.permute.xlu0 %298
      %302 = vrot.lane.b32.xlu0 %v220, 32
      %v303 = vpop.permute.xlu0 %302
      %306 = vrot.lane.b32.xlu0 %v236, 48
      %v307 = vpop.permute.xlu0 %306
      %310 = vrot.lane.b32.xlu0 %v228, 64
      %v311 = vpop.permute.xlu0 %310
      %314 = vrot.lane.b32.xlu0 %v238, 80
      %v315 = vpop.permute.xlu0 %314
      %318 = vrot.lane.b32.xlu0 %v232, 96
      %v319 = vpop.permute.xlu0 %318
      %322 = vrot.lane.b32.xlu0 %v240, 112
      %v323 = vpop.permute.xlu0 %322
      %326 = vrot.lane.b32.xlu0 %v290, 16
      %v327 = vpop.permute.xlu0 %326
      %330 = vrot.lane.b32.xlu0 %v276, 32
      %v331 = vpop.permute.xlu0 %330
      %334 = vrot.lane.b32.xlu0 %v292, 48
      %v335 = vpop.permute.xlu0 %334
      %338 = vrot.lane.b32.xlu0 %v284, 64
      %v339 = vpop.permute.xlu0 %338
      %342 = vrot.lane.b32.xlu0 %v294, 80
      %v343 = vpop.permute.xlu0 %342
      %346 = vrot.lane.b32.xlu0 %v288, 96
      %v347 = vpop.permute.xlu0 %346
      %350 = vrot.lane.b32.xlu0 %v296, 112
      %v351 = vpop.permute.xlu0 %350
      %vm353 = vcmask 130048
      %v354 = vsel %vm353, %v216, %v299
      %vm355 = vcmask 261120
      %v356 = vsel %vm355, %v354, %v303
      %vm357 = vcmask 392192
      %v358 = vsel %vm357, %v356, %v307
      %vm359 = vcmask 523264
      %v360 = vsel %vm359, %v358, %v311
      %vm361 = vcmask 654336
      %v362 = vsel %vm361, %v360, %v315
      %vm363 = vcmask 785408
      %v364 = vsel %vm363, %v362, %v319
      %vm365 = vcmask 916480
      %v366 = vsel %vm365, %v364, %v323
      %v367 = vsel %vm353, %v272, %v327
      %v368 = vsel %vm355, %v367, %v331
      %v369 = vsel %vm357, %v368, %v335
      %v370 = vsel %vm359, %v369, %v339
      %v371 = vsel %vm361, %v370, %v343
      %v372 = vsel %vm363, %v371, %v347
      %v373 = vsel %vm365, %v372, %v351
      %374 = vst [vmem:[#allocation2] sm:$0xf] %v366
      %375 = vst [vmem:[#allocation2 + $0x8] sm:$0xf] %v373
      %384 = vrot.lane.b32.xlu0 %v172, 127
      %v385 = vpop.permute.xlu0 %384
      %386 = vrot.lane.b32.xlu0 %v173, 127
      %v387 = vpop.permute.xlu0 %386
      %388 = vrot.lane.b32.xlu0 %v175, 127
      %v389 = vpop.permute.xlu0 %388
      %390 = vrot.lane.b32.xlu0 %v176, 127
      %v391 = vpop.permute.xlu0 %390
      %392 = vrot.lane.b32.xlu0 %v178, 127
      %v393 = vpop.permute.xlu0 %392
      %394 = vrot.lane.b32.xlu0 %v179, 127
      %v395 = vpop.permute.xlu0 %394
      %396 = vrot.lane.b32.xlu0 %v181, 127
      %v397 = vpop.permute.xlu0 %396
      %398 = vrot.lane.b32.xlu0 %v182, 127
      %v399 = vpop.permute.xlu0 %398
      %v408 = vrot.slane %v393, 4
      %v409 = vsel %vm185, %v408, %v385
      %v410 = vrot.slane %v385, 4
      %v411 = vsel %vm185, %v393, %v410
      %v413 = vunpack.c.l.s4 1983009808
      %v414 = vunpack.c.0.s8 %v413
      %v415 = vperm.slane %v409, %v414
      %v417 = vunpack.c.l.s4 1983009808
      %v418 = vunpack.c.0.s8 %v417
      %v419 = vperm.slane %v411, %v418
      %v420 = vrot.slane %v397, 4
      %v421 = vsel %vm185, %v420, %v389
      %v422 = vrot.slane %v389, 4
      %v423 = vsel %vm185, %v397, %v422
      %v425 = vunpack.c.l.s4 1983009808
      %v426 = vunpack.c.0.s8 %v425
      %v427 = vperm.slane %v421, %v426
      %v429 = vunpack.c.l.s4 1983009808
      %v430 = vunpack.c.0.s8 %v429
      %v431 = vperm.slane %v423, %v430
      %v432 = vrot.slane %v427, 4
      %v433 = vsel %vm185, %v432, %v415
      %v434 = vrot.slane %v415, 4
      %v435 = vsel %vm185, %v427, %v434
      %v437 = vunpack.c.l.s4 1934713408
      %v438 = vunpack.c.0.s8 %v437
      %v439 = vperm.slane %v433, %v438
      %v441 = vunpack.c.l.s4 1934713408
      %v442 = vunpack.c.0.s8 %v441
      %v443 = vperm.slane %v435, %v442
      %v444 = vrot.slane %v431, 4
      %v445 = vsel %vm185, %v444, %v419
      %v446 = vrot.slane %v419, 4
      %v447 = vsel %vm185, %v431, %v446
      %v449 = vunpack.c.l.s4 1934713408
      %v450 = vunpack.c.0.s8 %v449
      %v451 = vperm.slane %v445, %v450
      %v453 = vunpack.c.l.s4 1934713408
      %v454 = vunpack.c.0.s8 %v453
      %v455 = vperm.slane %v447, %v454
      %v456 = vrot.slane %v439, 4
      %v457 = vsel %vm185, 0.0, %v456
      %v458 = vrot.slane %v443, 4
      %v459 = vsel %vm185, 0.0, %v458
      %v460 = vrot.slane %v451, 4
      %v461 = vsel %vm185, 0.0, %v460
      %v462 = vrot.slane %v455, 4
      %v463 = vsel %vm185, 0.0, %v462
      %v464 = vrot.slane %v395, 4
      %v465 = vsel %vm185, %v464, %v387
      %v466 = vrot.slane %v387, 4
      %v467 = vsel %vm185, %v395, %v466
      %v469 = vunpack.c.l.s4 1983009808
      %v470 = vunpack.c.0.s8 %v469
      %v471 = vperm.slane %v465, %v470
      %v473 = vunpack.c.l.s4 1983009808
      %v474 = vunpack.c.0.s8 %v473
      %v475 = vperm.slane %v467, %v474
      %v476 = vrot.slane %v399, 4
      %v477 = vsel %vm185, %v476, %v391
      %v478 = vrot.slane %v391, 4
      %v479 = vsel %vm185, %v399, %v478
      %v481 = vunpack.c.l.s4 1983009808
      %v482 = vunpack.c.0.s8 %v481
      %v483 = vperm.slane %v477, %v482
      %v485 = vunpack.c.l.s4 1983009808
      %v486 = vunpack.c.0.s8 %v485
      %v487 = vperm.slane %v479, %v486
      %v488 = vrot.slane %v483, 4
      %v489 = vsel %vm185, %v488, %v471
      %v490 = vrot.slane %v471, 4
      %v491 = vsel %vm185, %v483, %v490
      %v493 = vunpack.c.l.s4 1934713408
      %v494 = vunpack.c.0.s8 %v493
      %v495 = vperm.slane %v489, %v494
      %v497 = vunpack.c.l.s4 1934713408
      %v498 = vunpack.c.0.s8 %v497
      %v499 = vperm.slane %v491, %v498
      %v500 = vrot.slane %v487, 4
      %v501 = vsel %vm185, %v500, %v475
      %v502 = vrot.slane %v475, 4
      %v503 = vsel %vm185, %v487, %v502
      %v505 = vunpack.c.l.s4 1934713408
      %v506 = vunpack.c.0.s8 %v505
      %v507 = vperm.slane %v501, %v506
      %v509 = vunpack.c.l.s4 1934713408
      %v510 = vunpack.c.0.s8 %v509
      %v511 = vperm.slane %v503, %v510
      %v512 = vrot.slane %v495, 4
      %v513 = vsel %vm185, 0.0, %v512
      %v514 = vrot.slane %v499, 4
      %v515 = vsel %vm185, 0.0, %v514
      %v516 = vrot.slane %v507, 4
      %v517 = vsel %vm185, 0.0, %v516
      %v518 = vrot.slane %v511, 4
      %v519 = vsel %vm185, 0.0, %v518
      %521 = vrot.lane.b32.xlu0 %v457, 16
      %v522 = vpop.permute.xlu0 %521
      %525 = vrot.lane.b32.xlu0 %v443, 32
      %v526 = vpop.permute.xlu0 %525
      %529 = vrot.lane.b32.xlu0 %v459, 48
      %v530 = vpop.permute.xlu0 %529
      %533 = vrot.lane.b32.xlu0 %v451, 64
      %v534 = vpop.permute.xlu0 %533
      %537 = vrot.lane.b32.xlu0 %v461, 80
      %v538 = vpop.permute.xlu0 %537
      %541 = vrot.lane.b32.xlu0 %v455, 96
      %v542 = vpop.permute.xlu0 %541
      %545 = vrot.lane.b32.xlu0 %v463, 112
      %v546 = vpop.permute.xlu0 %545
      %549 = vrot.lane.b32.xlu0 %v513, 16
      %v550 = vpop.permute.xlu0 %549
      %553 = vrot.lane.b32.xlu0 %v499, 32
      %v554 = vpop.permute.xlu0 %553
      %557 = vrot.lane.b32.xlu0 %v515, 48
      %v558 = vpop.permute.xlu0 %557
      %561 = vrot.lane.b32.xlu0 %v507, 64
      %v562 = vpop.permute.xlu0 %561
      %565 = vrot.lane.b32.xlu0 %v517, 80
      %v566 = vpop.permute.xlu0 %565
      %569 = vrot.lane.b32.xlu0 %v511, 96
      %v570 = vpop.permute.xlu0 %569
      %573 = vrot.lane.b32.xlu0 %v519, 112
      %v574 = vpop.permute.xlu0 %573
      %v576 = vsel %vm353, %v439, %v522
      %v577 = vsel %vm355, %v576, %v526
      %v578 = vsel %vm357, %v577, %v530
      %v579 = vsel %vm359, %v578, %v534
      %v580 = vsel %vm361, %v579, %v538
      %v581 = vsel %vm363, %v580, %v542
      %v582 = vsel %vm365, %v581, %v546
      %v583 = vsel %vm353, %v495, %v550
      %v584 = vsel %vm355, %v583, %v554
      %v585 = vsel %vm357, %v584, %v558
      %v586 = vsel %vm359, %v585, %v562
      %v587 = vsel %vm361, %v586, %v566
      %v588 = vsel %vm363, %v587, %v570
      %v589 = vsel %vm365, %v588, %v574
      %v592 = vrot.slane %v582, 4
      %v593 = vrot.slane %v589, 4
      %596 = vst [vmem:[#allocation2] sm:$0xf0] %v592
      %597 = vst [vmem:[#allocation2 + $0x8] sm:$0xf0] %v593
      %598 = vrot.lane.b32.xlu0 %v172, 126
      %v599 = vpop.permute.xlu0 %598
      %600 = vrot.lane.b32.xlu0 %v173, 126
      %v601 = vpop.permute.xlu0 %600
      %602 = vrot.lane.b32.xlu0 %v175, 126
      %v603 = vpop.permute.xlu0 %602
      %604 = vrot.lane.b32.xlu0 %v176, 126
      %v605 = vpop.permute.xlu0 %604
      %606 = vrot.lane.b32.xlu0 %v178, 126
      %v607 = vpop.permute.xlu0 %606
      %608 = vrot.lane.b32.xlu0 %v179, 126
      %v609 = vpop.permute.xlu0 %608
      %610 = vrot.lane.b32.xlu0 %v181, 126
      %v611 = vpop.permute.xlu0 %610
      %612 = vrot.lane.b32.xlu0 %v182, 126
      %v613 = vpop.permute.xlu0 %612
      %v622 = vrot.slane %v607, 4
      %v623 = vsel %vm185, %v622, %v599
      %v624 = vrot.slane %v599, 4
      %v625 = vsel %vm185, %v607, %v624
      %v627 = vunpack.c.l.s4 1983009808
      %v628 = vunpack.c.0.s8 %v627
      %v629 = vperm.slane %v623, %v628
      %v631 = vunpack.c.l.s4 1983009808
      %v632 = vunpack.c.0.s8 %v631
      %v633 = vperm.slane %v625, %v632
      %v634 = vrot.slane %v611, 4
      %v635 = vsel %vm185, %v634, %v603
      %v636 = vrot.slane %v603, 4
      %v637 = vsel %vm185, %v611, %v636
      %v639 = vunpack.c.l.s4 1983009808
      %v640 = vunpack.c.0.s8 %v639
      %v641 = vperm.slane %v635, %v640
      %v643 = vunpack.c.l.s4 1983009808
      %v644 = vunpack.c.0.s8 %v643
      %v645 = vperm.slane %v637, %v644
      %v646 = vrot.slane %v641, 4
      %v647 = vsel %vm185, %v646, %v629
      %v648 = vrot.slane %v629, 4
      %v649 = vsel %vm185, %v641, %v648
      %v651 = vunpack.c.l.s4 1934713408
      %v652 = vunpack.c.0.s8 %v651
      %v653 = vperm.slane %v647, %v652
      %v655 = vunpack.c.l.s4 1934713408
      %v656 = vunpack.c.0.s8 %v655
      %v657 = vperm.slane %v649, %v656
      %v658 = vrot.slane %v645, 4
      %v659 = vsel %vm185, %v658, %v633
      %v660 = vrot.slane %v633, 4
      %v661 = vsel %vm185, %v645, %v660
      %v663 = vunpack.c.l.s4 1934713408
      %v664 = vunpack.c.0.s8 %v663
      %v665 = vperm.slane %v659, %v664
      %v667 = vunpack.c.l.s4 1934713408
      %v668 = vunpack.c.0.s8 %v667
      %v669 = vperm.slane %v661, %v668
      %v670 = vrot.slane %v653, 4
      %v671 = vsel %vm185, 0.0, %v670
      %v672 = vrot.slane %v657, 4
      %v673 = vsel %vm185, 0.0, %v672
      %v674 = vrot.slane %v665, 4
      %v675 = vsel %vm185, 0.0, %v674
      %v676 = vrot.slane %v669, 4
      %v677 = vsel %vm185, 0.0, %v676
      %v678 = vrot.slane %v609, 4
      %v679 = vsel %vm185, %v678, %v601
      %v680 = vrot.slane %v601, 4
      %v681 = vsel %vm185, %v609, %v680
      %v683 = vunpack.c.l.s4 1983009808
      %v684 = vunpack.c.0.s8 %v683
      %v685 = vperm.slane %v679, %v684
      %v687 = vunpack.c.l.s4 1983009808
      %v688 = vunpack.c.0.s8 %v687
      %v689 = vperm.slane %v681, %v688
      %v690 = vrot.slane %v613, 4
      %v691 = vsel %vm185, %v690, %v605
      %v692 = vrot.slane %v605, 4
      %v693 = vsel %vm185, %v613, %v692
      %v695 = vunpack.c.l.s4 1983009808
      %v696 = vunpack.c.0.s8 %v695
      %v697 = vperm.slane %v691, %v696
      %v699 = vunpack.c.l.s4 1983009808
      %v700 = vunpack.c.0.s8 %v699
      %v701 = vperm.slane %v693, %v700
      %v702 = vrot.slane %v697, 4
      %v703 = vsel %vm185, %v702, %v685
      %v704 = vrot.slane %v685, 4
      %v705 = vsel %vm185, %v697, %v704
      %v707 = vunpack.c.l.s4 1934713408
      %v708 = vunpack.c.0.s8 %v707
      %v709 = vperm.slane %v703, %v708
      %v711 = vunpack.c.l.s4 1934713408
      %v712 = vunpack.c.0.s8 %v711
      %v713 = vperm.slane %v705, %v712
      %v714 = vrot.slane %v701, 4
      %v715 = vsel %vm185, %v714, %v689
      %v716 = vrot.slane %v689, 4
      %v717 = vsel %vm185, %v701, %v716
      %v719 = vunpack.c.l.s4 1934713408
      %v720 = vunpack.c.0.s8 %v719
      %v721 = vperm.slane %v715, %v720
      %v723 = vunpack.c.l.s4 1934713408
      %v724 = vunpack.c.0.s8 %v723
      %v725 = vperm.slane %v717, %v724
      %v726 = vrot.slane %v709, 4
      %v727 = vsel %vm185, 0.0, %v726
      %v728 = vrot.slane %v713, 4
      %v729 = vsel %vm185, 0.0, %v728
      %v730 = vrot.slane %v721, 4
      %v731 = vsel %vm185, 0.0, %v730
      %v732 = vrot.slane %v725, 4
      %v733 = vsel %vm185, 0.0, %v732
      %735 = vrot.lane.b32.xlu0 %v671, 16
      %v736 = vpop.permute.xlu0 %735
      %739 = vrot.lane.b32.xlu0 %v657, 32
      %v740 = vpop.permute.xlu0 %739
      %743 = vrot.lane.b32.xlu0 %v673, 48
      %v744 = vpop.permute.xlu0 %743
      %747 = vrot.lane.b32.xlu0 %v665, 64
      %v748 = vpop.permute.xlu0 %747
      %751 = vrot.lane.b32.xlu0 %v675, 80
      %v752 = vpop.permute.xlu0 %751
      %755 = vrot.lane.b32.xlu0 %v669, 96
      %v756 = vpop.permute.xlu0 %755
      %759 = vrot.lane.b32.xlu0 %v677, 112
      %v760 = vpop.permute.xlu0 %759
      %763 = vrot.lane.b32.xlu0 %v727, 16
      %v764 = vpop.permute.xlu0 %763
      %767 = vrot.lane.b32.xlu0 %v713, 32
      %v768 = vpop.permute.xlu0 %767
      %771 = vrot.lane.b32.xlu0 %v729, 48
      %v772 = vpop.permute.xlu0 %771
      %775 = vrot.lane.b32.xlu0 %v721, 64
      %v776 = vpop.permute.xlu0 %775
      %779 = vrot.lane.b32.xlu0 %v731, 80
      %v780 = vpop.permute.xlu0 %779
      %783 = vrot.lane.b32.xlu0 %v725, 96
      %v784 = vpop.permute.xlu0 %783
      %787 = vrot.lane.b32.xlu0 %v733, 112
      %v788 = vpop.permute.xlu0 %787
      %v790 = vsel %vm353, %v653, %v736
      %v791 = vsel %vm355, %v790, %v740
      %v792 = vsel %vm357, %v791, %v744
      %v793 = vsel %vm359, %v792, %v748
      %v794 = vsel %vm361, %v793, %v752
      %v795 = vsel %vm363, %v794, %v756
      %v796 = vsel %vm365, %v795, %v760
      %v797 = vsel %vm353, %v709, %v764
      %v798 = vsel %vm355, %v797, %v768
      %v799 = vsel %vm357, %v798, %v772
      %v800 = vsel %vm359, %v799, %v776
      %v801 = vsel %vm361, %v800, %v780
      %v802 = vsel %vm363, %v801, %v784
      %v803 = vsel %vm365, %v802, %v788
      %804 = vst [vmem:[#allocation2 + $0x10] sm:$0xf] %v796
      %805 = vst [vmem:[#allocation2 + $0x18] sm:$0xf] %v803
      %vm810 = vcmask 1046528
      %v811 = vrot.slane %v172, 1
      %v812 = vrot.slane %v173, 1
      %v813 = vsel %vm810, %v811, %v812
      %v814 = vrot.slane %v174, 1
      %v815 = vsel %vm810, %v812, %v814
      %v816 = vrot.slane %v175, 1
      %v817 = vrot.slane %v176, 1
      %v818 = vsel %vm810, %v816, %v817
      %v819 = vrot.slane %v177, 1
      %v820 = vsel %vm810, %v817, %v819
      %v821 = vrot.slane %v178, 1
      %v822 = vrot.slane %v179, 1
      %v823 = vsel %vm810, %v821, %v822
      %v824 = vrot.slane %v180, 1
      %v825 = vsel %vm810, %v822, %v824
      %v826 = vrot.slane %v181, 1
      %v827 = vrot.slane %v182, 1
      %v828 = vsel %vm810, %v826, %v827
      %v829 = vrot.slane %v183, 1
      %v830 = vsel %vm810, %v827, %v829
      %v839 = vrot.slane %v823, 4
      %v840 = vsel %vm185, %v839, %v813
      %v841 = vrot.slane %v813, 4
      %v842 = vsel %vm185, %v823, %v841
      %v844 = vunpack.c.l.s4 1983009808
      %v845 = vunpack.c.0.s8 %v844
      %v846 = vperm.slane %v840, %v845
      %v848 = vunpack.c.l.s4 1983009808
      %v849 = vunpack.c.0.s8 %v848
      %v850 = vperm.slane %v842, %v849
      %v851 = vrot.slane %v828, 4
      %v852 = vsel %vm185, %v851, %v818
      %v853 = vrot.slane %v818, 4
      %v854 = vsel %vm185, %v828, %v853
      %v856 = vunpack.c.l.s4 1983009808
      %v857 = vunpack.c.0.s8 %v856
      %v858 = vperm.slane %v852, %v857
      %v860 = vunpack.c.l.s4 1983009808
      %v861 = vunpack.c.0.s8 %v860
      %v862 = vperm.slane %v854, %v861
      %v863 = vrot.slane %v858, 4
      %v864 = vsel %vm185, %v863, %v846
      %v865 = vrot.slane %v846, 4
      %v866 = vsel %vm185, %v858, %v865
      %v868 = vunpack.c.l.s4 1934713408
      %v869 = vunpack.c.0.s8 %v868
      %v870 = vperm.slane %v864, %v869
      %v872 = vunpack.c.l.s4 1934713408
      %v873 = vunpack.c.0.s8 %v872
      %v874 = vperm.slane %v866, %v873
      %v875 = vrot.slane %v862, 4
      %v876 = vsel %vm185, %v875, %v850
      %v877 = vrot.slane %v850, 4
      %v878 = vsel %vm185, %v862, %v877
      %v880 = vunpack.c.l.s4 1934713408
      %v881 = vunpack.c.0.s8 %v880
      %v882 = vperm.slane %v876, %v881
      %v884 = vunpack.c.l.s4 1934713408
      %v885 = vunpack.c.0.s8 %v884
      %v886 = vperm.slane %v878, %v885
      %v887 = vrot.slane %v870, 4
      %v888 = vsel %vm185, 0.0, %v887
      %v889 = vrot.slane %v874, 4
      %v890 = vsel %vm185, 0.0, %v889
      %v891 = vrot.slane %v882, 4
      %v892 = vsel %vm185, 0.0, %v891
      %v893 = vrot.slane %v886, 4
      %v894 = vsel %vm185, 0.0, %v893
      %v895 = vrot.slane %v825, 4
      %v896 = vsel %vm185, %v895, %v815
      %v897 = vrot.slane %v815, 4
      %v898 = vsel %vm185, %v825, %v897
      %v900 = vunpack.c.l.s4 1983009808
      %v901 = vunpack.c.0.s8 %v900
      %v902 = vperm.slane %v896, %v901
      %v904 = vunpack.c.l.s4 1983009808
      %v905 = vunpack.c.0.s8 %v904
      %v906 = vperm.slane %v898, %v905
      %v907 = vrot.slane %v830, 4
      %v908 = vsel %vm185, %v907, %v820
      %v909 = vrot.slane %v820, 4
      %v910 = vsel %vm185, %v830, %v909
      %v912 = vunpack.c.l.s4 1983009808
      %v913 = vunpack.c.0.s8 %v912
      %v914 = vperm.slane %v908, %v913
      %v916 = vunpack.c.l.s4 1983009808
      %v917 = vunpack.c.0.s8 %v916
      %v918 = vperm.slane %v910, %v917
      %v919 = vrot.slane %v914, 4
      %v920 = vsel %vm185, %v919, %v902
      %v921 = vrot.slane %v902, 4
      %v922 = vsel %vm185, %v914, %v921
      %v924 = vunpack.c.l.s4 1934713408
      %v925 = vunpack.c.0.s8 %v924
      %v926 = vperm.slane %v920, %v925
      %v928 = vunpack.c.l.s4 1934713408
      %v929 = vunpack.c.0.s8 %v928
      %v930 = vperm.slane %v922, %v929
      %v931 = vrot.slane %v918, 4
      %v932 = vsel %vm185, %v931, %v906
      %v933 = vrot.slane %v906, 4
      %v934 = vsel %vm185, %v918, %v933
      %v936 = vunpack.c.l.s4 1934713408
      %v937 = vunpack.c.0.s8 %v936
      %v938 = vperm.slane %v932, %v937
      %v940 = vunpack.c.l.s4 1934713408
      %v941 = vunpack.c.0.s8 %v940
      %v942 = vperm.slane %v934, %v941
      %v943 = vrot.slane %v926, 4
      %v944 = vsel %vm185, 0.0, %v943
      %v945 = vrot.slane %v930, 4
      %v946 = vsel %vm185, 0.0, %v945
      %v947 = vrot.slane %v938, 4
      %v948 = vsel %vm185, 0.0, %v947
      %v949 = vrot.slane %v942, 4
      %v950 = vsel %vm185, 0.0, %v949
      %952 = vrot.lane.b32.xlu0 %v888, 16
      %v953 = vpop.permute.xlu0 %952
      %956 = vrot.lane.b32.xlu0 %v874, 32
      %v957 = vpop.permute.xlu0 %956
      %960 = vrot.lane.b32.xlu0 %v890, 48
      %v961 = vpop.permute.xlu0 %960
      %964 = vrot.lane.b32.xlu0 %v882, 64
      %v965 = vpop.permute.xlu0 %964
      %968 = vrot.lane.b32.xlu0 %v892, 80
      %v969 = vpop.permute.xlu0 %968
      %972 = vrot.lane.b32.xlu0 %v886, 96
      %v973 = vpop.permute.xlu0 %972
      %976 = vrot.lane.b32.xlu0 %v894, 112
      %v977 = vpop.permute.xlu0 %976
      %980 = vrot.lane.b32.xlu0 %v944, 16
      %v981 = vpop.permute.xlu0 %980
      %984 = vrot.lane.b32.xlu0 %v930, 32
      %v985 = vpop.permute.xlu0 %984
      %988 = vrot.lane.b32.xlu0 %v946, 48
      %v989 = vpop.permute.xlu0 %988
      %992 = vrot.lane.b32.xlu0 %v938, 64
      %v993 = vpop.permute.xlu0 %992
      %996 = vrot.lane.b32.xlu0 %v948, 80
      %v997 = vpop.permute.xlu0 %996
      %1000 = vrot.lane.b32.xlu0 %v942, 96
      %v1001 = vpop.permute.xlu0 %1000
      %1004 = vrot.lane.b32.xlu0 %v950, 112
      %v1005 = vpop.permute.xlu0 %1004
      %v1007 = vsel %vm353, %v870, %v953
      %v1008 = vsel %vm355, %v1007, %v957
      %v1009 = vsel %vm357, %v1008, %v961
      %v1010 = vsel %vm359, %v1009, %v965
      %v1011 = vsel %vm361, %v1010, %v969
      %v1012 = vsel %vm363, %v1011, %v973
      %v1013 = vsel %vm365, %v1012, %v977
      %v1014 = vsel %vm353, %v926, %v981
      %v1015 = vsel %vm355, %v1014, %v985
      %v1016 = vsel %vm357, %v1015, %v989
      %v1017 = vsel %vm359, %v1016, %v993
      %v1018 = vsel %vm361, %v1017, %v997
      %v1019 = vsel %vm363, %v1018, %v1001
      %v1020 = vsel %vm365, %v1019, %v1005
      %v1023 = vrot.slane %v1013, 4
      %v1024 = vrot.slane %v1020, 4
      %1027 = vst [vmem:[#allocation2 + $0x10] sm:$0xf0] %v1023
      %1028 = vst [vmem:[#allocation2 + $0x18] sm:$0xf0] %v1024
      %1029 = vrot.lane.b32.xlu0 %v813, 127
      %v1030 = vpop.permute.xlu0 %1029
      %1031 = vrot.lane.b32.xlu0 %v815, 127
      %v1032 = vpop.permute.xlu0 %1031
      %1033 = vrot.lane.b32.xlu0 %v818, 127
      %v1034 = vpop.permute.xlu0 %1033
      %1035 = vrot.lane.b32.xlu0 %v820, 127
      %v1036 = vpop.permute.xlu0 %1035
      %1037 = vrot.lane.b32.xlu0 %v823, 127
      %v1038 = vpop.permute.xlu0 %1037
      %1039 = vrot.lane.b32.xlu0 %v825, 127
      %v1040 = vpop.permute.xlu0 %1039
      %1041 = vrot.lane.b32.xlu0 %v828, 127
      %v1042 = vpop.permute.xlu0 %1041
      %1043 = vrot.lane.b32.xlu0 %v830, 127
      %v1044 = vpop.permute.xlu0 %1043
      %v1053 = vrot.slane %v1038, 4
      %v1054 = vsel %vm185, %v1053, %v1030
      %v1055 = vrot.slane %v1030, 4
      %v1056 = vsel %vm185, %v1038, %v1055
      %v1058 = vunpack.c.l.s4 1983009808
      %v1059 = vunpack.c.0.s8 %v1058
      %v1060 = vperm.slane %v1054, %v1059
      %v1062 = vunpack.c.l.s4 1983009808
      %v1063 = vunpack.c.0.s8 %v1062
      %v1064 = vperm.slane %v1056, %v1063
      %v1065 = vrot.slane %v1042, 4
      %v1066 = vsel %vm185, %v1065, %v1034
      %v1067 = vrot.slane %v1034, 4
      %v1068 = vsel %vm185, %v1042, %v1067
      %v1070 = vunpack.c.l.s4 1983009808
      %v1071 = vunpack.c.0.s8 %v1070
      %v1072 = vperm.slane %v1066, %v1071
      %v1074 = vunpack.c.l.s4 1983009808
      %v1075 = vunpack.c.0.s8 %v1074
      %v1076 = vperm.slane %v1068, %v1075
      %v1077 = vrot.slane %v1072, 4
      %v1078 = vsel %vm185, %v1077, %v1060
      %v1079 = vrot.slane %v1060, 4
      %v1080 = vsel %vm185, %v1072, %v1079
      %v1082 = vunpack.c.l.s4 1934713408
      %v1083 = vunpack.c.0.s8 %v1082
      %v1084 = vperm.slane %v1078, %v1083
      %v1086 = vunpack.c.l.s4 1934713408
      %v1087 = vunpack.c.0.s8 %v1086
      %v1088 = vperm.slane %v1080, %v1087
      %v1089 = vrot.slane %v1076, 4
      %v1090 = vsel %vm185, %v1089, %v1064
      %v1091 = vrot.slane %v1064, 4
      %v1092 = vsel %vm185, %v1076, %v1091
      %v1094 = vunpack.c.l.s4 1934713408
      %v1095 = vunpack.c.0.s8 %v1094
      %v1096 = vperm.slane %v1090, %v1095
      %v1098 = vunpack.c.l.s4 1934713408
      %v1099 = vunpack.c.0.s8 %v1098
      %v1100 = vperm.slane %v1092, %v1099
      %v1101 = vrot.slane %v1084, 4
      %v1102 = vsel %vm185, 0.0, %v1101
      %v1103 = vrot.slane %v1088, 4
      %v1104 = vsel %vm185, 0.0, %v1103
      %v1105 = vrot.slane %v1096, 4
      %v1106 = vsel %vm185, 0.0, %v1105
      %v1107 = vrot.slane %v1100, 4
      %v1108 = vsel %vm185, 0.0, %v1107
      %v1109 = vrot.slane %v1040, 4
      %v1110 = vsel %vm185, %v1109, %v1032
      %v1111 = vrot.slane %v1032, 4
      %v1112 = vsel %vm185, %v1040, %v1111
      %v1114 = vunpack.c.l.s4 1983009808
      %v1115 = vunpack.c.0.s8 %v1114
      %v1116 = vperm.slane %v1110, %v1115
      %v1118 = vunpack.c.l.s4 1983009808
      %v1119 = vunpack.c.0.s8 %v1118
      %v1120 = vperm.slane %v1112, %v1119
      %v1121 = vrot.slane %v1044, 4
      %v1122 = vsel %vm185, %v1121, %v1036
      %v1123 = vrot.slane %v1036, 4
      %v1124 = vsel %vm185, %v1044, %v1123
      %v1126 = vunpack.c.l.s4 1983009808
      %v1127 = vunpack.c.0.s8 %v1126
      %v1128 = vperm.slane %v1122, %v1127
      %v1130 = vunpack.c.l.s4 1983009808
      %v1131 = vunpack.c.0.s8 %v1130
      %v1132 = vperm.slane %v1124, %v1131
      %v1133 = vrot.slane %v1128, 4
      %v1134 = vsel %vm185, %v1133, %v1116
      %v1135 = vrot.slane %v1116, 4
      %v1136 = vsel %vm185, %v1128, %v1135
      %v1138 = vunpack.c.l.s4 1934713408
      %v1139 = vunpack.c.0.s8 %v1138
      %v1140 = vperm.slane %v1134, %v1139
      %v1142 = vunpack.c.l.s4 1934713408
      %v1143 = vunpack.c.0.s8 %v1142
      %v1144 = vperm.slane %v1136, %v1143
      %v1145 = vrot.slane %v1132, 4
      %v1146 = vsel %vm185, %v1145, %v1120
      %v1147 = vrot.slane %v1120, 4
      %v1148 = vsel %vm185, %v1132, %v1147
      %v1150 = vunpack.c.l.s4 1934713408
      %v1151 = vunpack.c.0.s8 %v1150
      %v1152 = vperm.slane %v1146, %v1151
      %v1154 = vunpack.c.l.s4 1934713408
      %v1155 = vunpack.c.0.s8 %v1154
      %v1156 = vperm.slane %v1148, %v1155
      %v1157 = vrot.slane %v1140, 4
      %v1158 = vsel %vm185, 0.0, %v1157
      %v1159 = vrot.slane %v1144, 4
      %v1160 = vsel %vm185, 0.0, %v1159
      %v1161 = vrot.slane %v1152, 4
      %v1162 = vsel %vm185, 0.0, %v1161
      %v1163 = vrot.slane %v1156, 4
      %v1164 = vsel %vm185, 0.0, %v1163
      %1166 = vrot.lane.b32.xlu0 %v1102, 16
      %v1167 = vpop.permute.xlu0 %1166
      %1170 = vrot.lane.b32.xlu0 %v1088, 32
      %v1171 = vpop.permute.xlu0 %1170
      %1174 = vrot.lane.b32.xlu0 %v1104, 48
      %v1175 = vpop.permute.xlu0 %1174
      %1178 = vrot.lane.b32.xlu0 %v1096, 64
      %v1179 = vpop.permute.xlu0 %1178
      %1182 = vrot.lane.b32.xlu0 %v1106, 80
      %v1183 = vpop.permute.xlu0 %1182
      %1186 = vrot.lane.b32.xlu0 %v1100, 96
      %v1187 = vpop.permute.xlu0 %1186
      %1190 = vrot.lane.b32.xlu0 %v1108, 112
      %v1191 = vpop.permute.xlu0 %1190
      %1194 = vrot.lane.b32.xlu0 %v1158, 16
      %v1195 = vpop.permute.xlu0 %1194
      %1198 = vrot.lane.b32.xlu0 %v1144, 32
      %v1199 = vpop.permute.xlu0 %1198
      %1202 = vrot.lane.b32.xlu0 %v1160, 48
      %v1203 = vpop.permute.xlu0 %1202
      %1206 = vrot.lane.b32.xlu0 %v1152, 64
      %v1207 = vpop.permute.xlu0 %1206
      %1210 = vrot.lane.b32.xlu0 %v1162, 80
      %v1211 = vpop.permute.xlu0 %1210
      %1214 = vrot.lane.b32.xlu0 %v1156, 96
      %v1215 = vpop.permute.xlu0 %1214
      %1218 = vrot.lane.b32.xlu0 %v1164, 112
      %v1219 = vpop.permute.xlu0 %1218
      %v1221 = vsel %vm353, %v1084, %v1167
      %v1222 = vsel %vm355, %v1221, %v1171
      %v1223 = vsel %vm357, %v1222, %v1175
      %v1224 = vsel %vm359, %v1223, %v1179
      %v1225 = vsel %vm361, %v1224, %v1183
      %v1226 = vsel %vm363, %v1225, %v1187
      %v1227 = vsel %vm365, %v1226, %v1191
      %v1228 = vsel %vm353, %v1140, %v1195
      %v1229 = vsel %vm355, %v1228, %v1199
      %v1230 = vsel %vm357, %v1229, %v1203
      %v1231 = vsel %vm359, %v1230, %v1207
      %v1232 = vsel %vm361, %v1231, %v1211
      %v1233 = vsel %vm363, %v1232, %v1215
      %v1234 = vsel %vm365, %v1233, %v1219
      %1235 = vst [vmem:[#allocation2 + $0x20] sm:$0xf] %v1227
      %1236 = vst [vmem:[#allocation2 + $0x28] sm:$0xf] %v1234
      %1237 = vrot.lane.b32.xlu0 %v813, 126
      %v1238 = vpop.permute.xlu0 %1237
      %1239 = vrot.lane.b32.xlu0 %v815, 126
      %v1240 = vpop.permute.xlu0 %1239
      %1241 = vrot.lane.b32.xlu0 %v818, 126
      %v1242 = vpop.permute.xlu0 %1241
      %1243 = vrot.lane.b32.xlu0 %v820, 126
      %v1244 = vpop.permute.xlu0 %1243
      %1245 = vrot.lane.b32.xlu0 %v823, 126
      %v1246 = vpop.permute.xlu0 %1245
      %1247 = vrot.lane.b32.xlu0 %v825, 126
      %v1248 = vpop.permute.xlu0 %1247
      %1249 = vrot.lane.b32.xlu0 %v828, 126
      %v1250 = vpop.permute.xlu0 %1249
      %1251 = vrot.lane.b32.xlu0 %v830, 126
      %v1252 = vpop.permute.xlu0 %1251
      %v1261 = vrot.slane %v1246, 4
      %v1262 = vsel %vm185, %v1261, %v1238
      %v1263 = vrot.slane %v1238, 4
      %v1264 = vsel %vm185, %v1246, %v1263
      %v1266 = vunpack.c.l.s4 1983009808
      %v1267 = vunpack.c.0.s8 %v1266
      %v1268 = vperm.slane %v1262, %v1267
      %v1270 = vunpack.c.l.s4 1983009808
      %v1271 = vunpack.c.0.s8 %v1270
      %v1272 = vperm.slane %v1264, %v1271
      %v1273 = vrot.slane %v1250, 4
      %v1274 = vsel %vm185, %v1273, %v1242
      %v1275 = vrot.slane %v1242, 4
      %v1276 = vsel %vm185, %v1250, %v1275
      %v1278 = vunpack.c.l.s4 1983009808
      %v1279 = vunpack.c.0.s8 %v1278
      %v1280 = vperm.slane %v1274, %v1279
      %v1282 = vunpack.c.l.s4 1983009808
      %v1283 = vunpack.c.0.s8 %v1282
      %v1284 = vperm.slane %v1276, %v1283
      %v1285 = vrot.slane %v1280, 4
      %v1286 = vsel %vm185, %v1285, %v1268
      %v1287 = vrot.slane %v1268, 4
      %v1288 = vsel %vm185, %v1280, %v1287
      %v1290 = vunpack.c.l.s4 1934713408
      %v1291 = vunpack.c.0.s8 %v1290
      %v1292 = vperm.slane %v1286, %v1291
      %v1294 = vunpack.c.l.s4 1934713408
      %v1295 = vunpack.c.0.s8 %v1294
      %v1296 = vperm.slane %v1288, %v1295
      %v1297 = vrot.slane %v1284, 4
      %v1298 = vsel %vm185, %v1297, %v1272
      %v1299 = vrot.slane %v1272, 4
      %v1300 = vsel %vm185, %v1284, %v1299
      %v1302 = vunpack.c.l.s4 1934713408
      %v1303 = vunpack.c.0.s8 %v1302
      %v1304 = vperm.slane %v1298, %v1303
      %v1306 = vunpack.c.l.s4 1934713408
      %v1307 = vunpack.c.0.s8 %v1306
      %v1308 = vperm.slane %v1300, %v1307
      %v1309 = vrot.slane %v1292, 4
      %v1310 = vsel %vm185, 0.0, %v1309
      %v1311 = vrot.slane %v1296, 4
      %v1312 = vsel %vm185, 0.0, %v1311
      %v1313 = vrot.slane %v1304, 4
      %v1314 = vsel %vm185, 0.0, %v1313
      %v1315 = vrot.slane %v1308, 4
      %v1316 = vsel %vm185, 0.0, %v1315
      %v1317 = vrot.slane %v1248, 4
      %v1318 = vsel %vm185, %v1317, %v1240
      %v1319 = vrot.slane %v1240, 4
      %v1320 = vsel %vm185, %v1248, %v1319
      %v1322 = vunpack.c.l.s4 1983009808
      %v1323 = vunpack.c.0.s8 %v1322
      %v1324 = vperm.slane %v1318, %v1323
      %v1326 = vunpack.c.l.s4 1983009808
      %v1327 = vunpack.c.0.s8 %v1326
      %v1328 = vperm.slane %v1320, %v1327
      %v1329 = vrot.slane %v1252, 4
      %v1330 = vsel %vm185, %v1329, %v1244
      %v1331 = vrot.slane %v1244, 4
      %v1332 = vsel %vm185, %v1252, %v1331
      %v1334 = vunpack.c.l.s4 1983009808
      %v1335 = vunpack.c.0.s8 %v1334
      %v1336 = vperm.slane %v1330, %v1335
      %v1338 = vunpack.c.l.s4 1983009808
      %v1339 = vunpack.c.0.s8 %v1338
      %v1340 = vperm.slane %v1332, %v1339
      %v1341 = vrot.slane %v1336, 4
      %v1342 = vsel %vm185, %v1341, %v1324
      %v1343 = vrot.slane %v1324, 4
      %v1344 = vsel %vm185, %v1336, %v1343
      %v1346 = vunpack.c.l.s4 1934713408
      %v1347 = vunpack.c.0.s8 %v1346
      %v1348 = vperm.slane %v1342, %v1347
      %v1350 = vunpack.c.l.s4 1934713408
      %v1351 = vunpack.c.0.s8 %v1350
      %v1352 = vperm.slane %v1344, %v1351
      %v1353 = vrot.slane %v1340, 4
      %v1354 = vsel %vm185, %v1353, %v1328
      %v1355 = vrot.slane %v1328, 4
      %v1356 = vsel %vm185, %v1340, %v1355
      %v1358 = vunpack.c.l.s4 1934713408
      %v1359 = vunpack.c.0.s8 %v1358
      %v1360 = vperm.slane %v1354, %v1359
      %v1362 = vunpack.c.l.s4 1934713408
      %v1363 = vunpack.c.0.s8 %v1362
      %v1364 = vperm.slane %v1356, %v1363
      %v1365 = vrot.slane %v1348, 4
      %v1366 = vsel %vm185, 0.0, %v1365
      %v1367 = vrot.slane %v1352, 4
      %v1368 = vsel %vm185, 0.0, %v1367
      %v1369 = vrot.slane %v1360, 4
      %v1370 = vsel %vm185, 0.0, %v1369
      %v1371 = vrot.slane %v1364, 4
      %v1372 = vsel %vm185, 0.0, %v1371
      %1374 = vrot.lane.b32.xlu0 %v1310, 16
      %v1375 = vpop.permute.xlu0 %1374
      %1378 = vrot.lane.b32.xlu0 %v1296, 32
      %v1379 = vpop.permute.xlu0 %1378
      %1382 = vrot.lane.b32.xlu0 %v1312, 48
      %v1383 = vpop.permute.xlu0 %1382
      %1386 = vrot.lane.b32.xlu0 %v1304, 64
      %v1387 = vpop.permute.xlu0 %1386
      %1390 = vrot.lane.b32.xlu0 %v1314, 80
      %v1391 = vpop.permute.xlu0 %1390
      %1394 = vrot.lane.b32.xlu0 %v1308, 96
      %v1395 = vpop.permute.xlu0 %1394
      %1398 = vrot.lane.b32.xlu0 %v1316, 112
      %v1399 = vpop.permute.xlu0 %1398
      %1402 = vrot.lane.b32.xlu0 %v1366, 16
      %v1403 = vpop.permute.xlu0 %1402
      %1406 = vrot.lane.b32.xlu0 %v1352, 32
      %v1407 = vpop.permute.xlu0 %1406
      %1410 = vrot.lane.b32.xlu0 %v1368, 48
      %v1411 = vpop.permute.xlu0 %1410
      %1414 = vrot.lane.b32.xlu0 %v1360, 64
      %v1415 = vpop.permute.xlu0 %1414
      %1418 = vrot.lane.b32.xlu0 %v1370, 80
      %v1419 = vpop.permute.xlu0 %1418
      %1422 = vrot.lane.b32.xlu0 %v1364, 96
      %v1423 = vpop.permute.xlu0 %1422
      %1426 = vrot.lane.b32.xlu0 %v1372, 112
      %v1427 = vpop.permute.xlu0 %1426
      %v1429 = vsel %vm353, %v1292, %v1375
      %v1430 = vsel %vm355, %v1429, %v1379
      %v1431 = vsel %vm357, %v1430, %v1383
      %v1432 = vsel %vm359, %v1431, %v1387
      %v1433 = vsel %vm361, %v1432, %v1391
      %v1434 = vsel %vm363, %v1433, %v1395
      %v1435 = vsel %vm365, %v1434, %v1399
      %v1436 = vsel %vm353, %v1348, %v1403
      %v1437 = vsel %vm355, %v1436, %v1407
      %v1438 = vsel %vm357, %v1437, %v1411
      %v1439 = vsel %vm359, %v1438, %v1415
      %v1440 = vsel %vm361, %v1439, %v1419
      %v1441 = vsel %vm363, %v1440, %v1423
      %v1442 = vsel %vm365, %v1441, %v1427
      %v1445 = vrot.slane %v1435, 4
      %v1446 = vrot.slane %v1442, 4
      %1449 = vst [vmem:[#allocation2 + $0x20] sm:$0xf0] %v1445
      %1450 = vst [vmem:[#allocation2 + $0x28] sm:$0xf0] %v1446
      %vm1451 = vcmask 1045504
      %v1452 = vrot.slane %v172, 2
      %v1453 = vrot.slane %v173, 2
      %v1454 = vsel %vm1451, %v1452, %v1453
      %v1455 = vrot.slane %v174, 2
      %v1456 = vsel %vm1451, %v1453, %v1455
      %v1457 = vrot.slane %v175, 2
      %v1458 = vrot.slane %v176, 2
      %v1459 = vsel %vm1451, %v1457, %v1458
      %v1460 = vrot.slane %v177, 2
      %v1461 = vsel %vm1451, %v1458, %v1460
      %v1462 = vrot.slane %v178, 2
      %v1463 = vrot.slane %v179, 2
      %v1464 = vsel %vm1451, %v1462, %v1463
      %v1465 = vrot.slane %v180, 2
      %v1466 = vsel %vm1451, %v1463, %v1465
      %v1467 = vrot.slane %v181, 2
      %v1468 = vrot.slane %v182, 2
      %v1469 = vsel %vm1451, %v1467, %v1468
      %v1470 = vrot.slane %v183, 2
      %v1471 = vsel %vm1451, %v1468, %v1470
      %v1480 = vrot.slane %v1464, 4
      %v1481 = vsel %vm185, %v1480, %v1454
      %v1482 = vrot.slane %v1454, 4
      %v1483 = vsel %vm185, %v1464, %v1482
      %v1485 = vunpack.c.l.s4 1983009808
      %v1486 = vunpack.c.0.s8 %v1485
      %v1487 = vperm.slane %v1481, %v1486
      %v1489 = vunpack.c.l.s4 1983009808
      %v1490 = vunpack.c.0.s8 %v1489
      %v1491 = vperm.slane %v1483, %v1490
      %v1492 = vrot.slane %v1469, 4
      %v1493 = vsel %vm185, %v1492, %v1459
      %v1494 = vrot.slane %v1459, 4
      %v1495 = vsel %vm185, %v1469, %v1494
      %v1497 = vunpack.c.l.s4 1983009808
      %v1498 = vunpack.c.0.s8 %v1497
      %v1499 = vperm.slane %v1493, %v1498
      %v1501 = vunpack.c.l.s4 1983009808
      %v1502 = vunpack.c.0.s8 %v1501
      %v1503 = vperm.slane %v1495, %v1502
      %v1504 = vrot.slane %v1499, 4
      %v1505 = vsel %vm185, %v1504, %v1487
      %v1506 = vrot.slane %v1487, 4
      %v1507 = vsel %vm185, %v1499, %v1506
      %v1509 = vunpack.c.l.s4 1934713408
      %v1510 = vunpack.c.0.s8 %v1509
      %v1511 = vperm.slane %v1505, %v1510
      %v1513 = vunpack.c.l.s4 1934713408
      %v1514 = vunpack.c.0.s8 %v1513
      %v1515 = vperm.slane %v1507, %v1514
      %v1516 = vrot.slane %v1503, 4
      %v1517 = vsel %vm185, %v1516, %v1491
      %v1518 = vrot.slane %v1491, 4
      %v1519 = vsel %vm185, %v1503, %v1518
      %v1521 = vunpack.c.l.s4 1934713408
      %v1522 = vunpack.c.0.s8 %v1521
      %v1523 = vperm.slane %v1517, %v1522
      %v1525 = vunpack.c.l.s4 1934713408
      %v1526 = vunpack.c.0.s8 %v1525
      %v1527 = vperm.slane %v1519, %v1526
      %v1528 = vrot.slane %v1511, 4
      %v1529 = vsel %vm185, 0.0, %v1528
      %v1530 = vrot.slane %v1515, 4
      %v1531 = vsel %vm185, 0.0, %v1530
      %v1532 = vrot.slane %v1523, 4
      %v1533 = vsel %vm185, 0.0, %v1532
      %v1534 = vrot.slane %v1527, 4
      %v1535 = vsel %vm185, 0.0, %v1534
      %v1536 = vrot.slane %v1466, 4
      %v1537 = vsel %vm185, %v1536, %v1456
      %v1538 = vrot.slane %v1456, 4
      %v1539 = vsel %vm185, %v1466, %v1538
      %v1541 = vunpack.c.l.s4 1983009808
      %v1542 = vunpack.c.0.s8 %v1541
      %v1543 = vperm.slane %v1537, %v1542
      %v1545 = vunpack.c.l.s4 1983009808
      %v1546 = vunpack.c.0.s8 %v1545
      %v1547 = vperm.slane %v1539, %v1546
      %v1548 = vrot.slane %v1471, 4
      %v1549 = vsel %vm185, %v1548, %v1461
      %v1550 = vrot.slane %v1461, 4
      %v1551 = vsel %vm185, %v1471, %v1550
      %v1553 = vunpack.c.l.s4 1983009808
      %v1554 = vunpack.c.0.s8 %v1553
      %v1555 = vperm.slane %v1549, %v1554
      %v1557 = vunpack.c.l.s4 1983009808
      %v1558 = vunpack.c.0.s8 %v1557
      %v1559 = vperm.slane %v1551, %v1558
      %v1560 = vrot.slane %v1555, 4
      %v1561 = vsel %vm185, %v1560, %v1543
      %v1562 = vrot.slane %v1543, 4
      %v1563 = vsel %vm185, %v1555, %v1562
      %v1565 = vunpack.c.l.s4 1934713408
      %v1566 = vunpack.c.0.s8 %v1565
      %v1567 = vperm.slane %v1561, %v1566
      %v1569 = vunpack.c.l.s4 1934713408
      %v1570 = vunpack.c.0.s8 %v1569
      %v1571 = vperm.slane %v1563, %v1570
      %v1572 = vrot.slane %v1559, 4
      %v1573 = vsel %vm185, %v1572, %v1547
      %v1574 = vrot.slane %v1547, 4
      %v1575 = vsel %vm185, %v1559, %v1574
      %v1577 = vunpack.c.l.s4 1934713408
      %v1578 = vunpack.c.0.s8 %v1577
      %v1579 = vperm.slane %v1573, %v1578
      %v1581 = vunpack.c.l.s4 1934713408
      %v1582 = vunpack.c.0.s8 %v1581
      %v1583 = vperm.slane %v1575, %v1582
      %v1584 = vrot.slane %v1567, 4
      %v1585 = vsel %vm185, 0.0, %v1584
      %v1586 = vrot.slane %v1571, 4
      %v1587 = vsel %vm185, 0.0, %v1586
      %v1588 = vrot.slane %v1579, 4
      %v1589 = vsel %vm185, 0.0, %v1588
      %v1590 = vrot.slane %v1583, 4
      %v1591 = vsel %vm185, 0.0, %v1590
      %1593 = vrot.lane.b32.xlu0 %v1529, 16
      %v1594 = vpop.permute.xlu0 %1593
      %1597 = vrot.lane.b32.xlu0 %v1515, 32
      %v1598 = vpop.permute.xlu0 %1597
      %1601 = vrot.lane.b32.xlu0 %v1531, 48
      %v1602 = vpop.permute.xlu0 %1601
      %1605 = vrot.lane.b32.xlu0 %v1523, 64
      %v1606 = vpop.permute.xlu0 %1605
      %1609 = vrot.lane.b32.xlu0 %v1533, 80
      %v1610 = vpop.permute.xlu0 %1609
      %1613 = vrot.lane.b32.xlu0 %v1527, 96
      %v1614 = vpop.permute.xlu0 %1613
      %1617 = vrot.lane.b32.xlu0 %v1535, 112
      %v1618 = vpop.permute.xlu0 %1617
      %1621 = vrot.lane.b32.xlu0 %v1585, 16
      %v1622 = vpop.permute.xlu0 %1621
      %1625 = vrot.lane.b32.xlu0 %v1571, 32
      %v1626 = vpop.permute.xlu0 %1625
      %1629 = vrot.lane.b32.xlu0 %v1587, 48
      %v1630 = vpop.permute.xlu0 %1629
      %1633 = vrot.lane.b32.xlu0 %v1579, 64
      %v1634 = vpop.permute.xlu0 %1633
      %1637 = vrot.lane.b32.xlu0 %v1589, 80
      %v1638 = vpop.permute.xlu0 %1637
      %1641 = vrot.lane.b32.xlu0 %v1583, 96
      %v1642 = vpop.permute.xlu0 %1641
      %1645 = vrot.lane.b32.xlu0 %v1591, 112
      %v1646 = vpop.permute.xlu0 %1645
      %v1648 = vsel %vm353, %v1511, %v1594
      %v1649 = vsel %vm355, %v1648, %v1598
      %v1650 = vsel %vm357, %v1649, %v1602
      %v1651 = vsel %vm359, %v1650, %v1606
      %v1652 = vsel %vm361, %v1651, %v1610
      %v1653 = vsel %vm363, %v1652, %v1614
      %v1654 = vsel %vm365, %v1653, %v1618
      %v1655 = vsel %vm353, %v1567, %v1622
      %v1656 = vsel %vm355, %v1655, %v1626
      %v1657 = vsel %vm357, %v1656, %v1630
      %v1658 = vsel %vm359, %v1657, %v1634
      %v1659 = vsel %vm361, %v1658, %v1638
      %v1660 = vsel %vm363, %v1659, %v1642
      %v1661 = vsel %vm365, %v1660, %v1646
      %1662 = vst [vmem:[#allocation2 + $0x30] sm:$0xf] %v1654
      %1663 = vst [vmem:[#allocation2 + $0x38] sm:$0xf] %v1661
      %1664 = vrot.lane.b32.xlu0 %v1454, 127
      %v1665 = vpop.permute.xlu0 %1664
      %1666 = vrot.lane.b32.xlu0 %v1456, 127
      %v1667 = vpop.permute.xlu0 %1666
      %1668 = vrot.lane.b32.xlu0 %v1459, 127
      %v1669 = vpop.permute.xlu0 %1668
      %1670 = vrot.lane.b32.xlu0 %v1461, 127
      %v1671 = vpop.permute.xlu0 %1670
      %1672 = vrot.lane.b32.xlu0 %v1464, 127
      %v1673 = vpop.permute.xlu0 %1672
      %1674 = vrot.lane.b32.xlu0 %v1466, 127
      %v1675 = vpop.permute.xlu0 %1674
      %1676 = vrot.lane.b32.xlu0 %v1469, 127
      %v1677 = vpop.permute.xlu0 %1676
      %1678 = vrot.lane.b32.xlu0 %v1471, 127
      %v1679 = vpop.permute.xlu0 %1678
      %v1688 = vrot.slane %v1673, 4
      %v1689 = vsel %vm185, %v1688, %v1665
      %v1690 = vrot.slane %v1665, 4
      %v1691 = vsel %vm185, %v1673, %v1690
      %v1693 = vunpack.c.l.s4 1983009808
      %v1694 = vunpack.c.0.s8 %v1693
      %v1695 = vperm.slane %v1689, %v1694
      %v1697 = vunpack.c.l.s4 1983009808
      %v1698 = vunpack.c.0.s8 %v1697
      %v1699 = vperm.slane %v1691, %v1698
      %v1700 = vrot.slane %v1677, 4
      %v1701 = vsel %vm185, %v1700, %v1669
      %v1702 = vrot.slane %v1669, 4
      %v1703 = vsel %vm185, %v1677, %v1702
      %v1705 = vunpack.c.l.s4 1983009808
      %v1706 = vunpack.c.0.s8 %v1705
      %v1707 = vperm.slane %v1701, %v1706
      %v1709 = vunpack.c.l.s4 1983009808
      %v1710 = vunpack.c.0.s8 %v1709
      %v1711 = vperm.slane %v1703, %v1710
      %v1712 = vrot.slane %v1707, 4
      %v1713 = vsel %vm185, %v1712, %v1695
      %v1714 = vrot.slane %v1695, 4
      %v1715 = vsel %vm185, %v1707, %v1714
      %v1717 = vunpack.c.l.s4 1934713408
      %v1718 = vunpack.c.0.s8 %v1717
      %v1719 = vperm.slane %v1713, %v1718
      %v1721 = vunpack.c.l.s4 1934713408
      %v1722 = vunpack.c.0.s8 %v1721
      %v1723 = vperm.slane %v1715, %v1722
      %v1724 = vrot.slane %v1711, 4
      %v1725 = vsel %vm185, %v1724, %v1699
      %v1726 = vrot.slane %v1699, 4
      %v1727 = vsel %vm185, %v1711, %v1726
      %v1729 = vunpack.c.l.s4 1934713408
      %v1730 = vunpack.c.0.s8 %v1729
      %v1731 = vperm.slane %v1725, %v1730
      %v1733 = vunpack.c.l.s4 1934713408
      %v1734 = vunpack.c.0.s8 %v1733
      %v1735 = vperm.slane %v1727, %v1734
      %v1736 = vrot.slane %v1719, 4
      %v1737 = vsel %vm185, 0.0, %v1736
      %v1738 = vrot.slane %v1723, 4
      %v1739 = vsel %vm185, 0.0, %v1738
      %v1740 = vrot.slane %v1731, 4
      %v1741 = vsel %vm185, 0.0, %v1740
      %v1742 = vrot.slane %v1735, 4
      %v1743 = vsel %vm185, 0.0, %v1742
      %v1744 = vrot.slane %v1675, 4
      %v1745 = vsel %vm185, %v1744, %v1667
      %v1746 = vrot.slane %v1667, 4
      %v1747 = vsel %vm185, %v1675, %v1746
      %v1749 = vunpack.c.l.s4 1983009808
      %v1750 = vunpack.c.0.s8 %v1749
      %v1751 = vperm.slane %v1745, %v1750
      %v1753 = vunpack.c.l.s4 1983009808
      %v1754 = vunpack.c.0.s8 %v1753
      %v1755 = vperm.slane %v1747, %v1754
      %v1756 = vrot.slane %v1679, 4
      %v1757 = vsel %vm185, %v1756, %v1671
      %v1758 = vrot.slane %v1671, 4
      %v1759 = vsel %vm185, %v1679, %v1758
      %v1761 = vunpack.c.l.s4 1983009808
      %v1762 = vunpack.c.0.s8 %v1761
      %v1763 = vperm.slane %v1757, %v1762
      %v1765 = vunpack.c.l.s4 1983009808
      %v1766 = vunpack.c.0.s8 %v1765
      %v1767 = vperm.slane %v1759, %v1766
      %v1768 = vrot.slane %v1763, 4
      %v1769 = vsel %vm185, %v1768, %v1751
      %v1770 = vrot.slane %v1751, 4
      %v1771 = vsel %vm185, %v1763, %v1770
      %v1773 = vunpack.c.l.s4 1934713408
      %v1774 = vunpack.c.0.s8 %v1773
      %v1775 = vperm.slane %v1769, %v1774
      %v1777 = vunpack.c.l.s4 1934713408
      %v1778 = vunpack.c.0.s8 %v1777
      %v1779 = vperm.slane %v1771, %v1778
      %v1780 = vrot.slane %v1767, 4
      %v1781 = vsel %vm185, %v1780, %v1755
      %v1782 = vrot.slane %v1755, 4
      %v1783 = vsel %vm185, %v1767, %v1782
      %v1785 = vunpack.c.l.s4 1934713408
      %v1786 = vunpack.c.0.s8 %v1785
      %v1787 = vperm.slane %v1781, %v1786
      %v1789 = vunpack.c.l.s4 1934713408
      %v1790 = vunpack.c.0.s8 %v1789
      %v1791 = vperm.slane %v1783, %v1790
      %v1792 = vrot.slane %v1775, 4
      %v1793 = vsel %vm185, 0.0, %v1792
      %v1794 = vrot.slane %v1779, 4
      %v1795 = vsel %vm185, 0.0, %v1794
      %v1796 = vrot.slane %v1787, 4
      %v1797 = vsel %vm185, 0.0, %v1796
      %v1798 = vrot.slane %v1791, 4
      %v1799 = vsel %vm185, 0.0, %v1798
      %1801 = vrot.lane.b32.xlu0 %v1737, 16
      %v1802 = vpop.permute.xlu0 %1801
      %1805 = vrot.lane.b32.xlu0 %v1723, 32
      %v1806 = vpop.permute.xlu0 %1805
      %1809 = vrot.lane.b32.xlu0 %v1739, 48
      %v1810 = vpop.permute.xlu0 %1809
      %1813 = vrot.lane.b32.xlu0 %v1731, 64
      %v1814 = vpop.permute.xlu0 %1813
      %1817 = vrot.lane.b32.xlu0 %v1741, 80
      %v1818 = vpop.permute.xlu0 %1817
      %1821 = vrot.lane.b32.xlu0 %v1735, 96
      %v1822 = vpop.permute.xlu0 %1821
      %1825 = vrot.lane.b32.xlu0 %v1743, 112
      %v1826 = vpop.permute.xlu0 %1825
      %1829 = vrot.lane.b32.xlu0 %v1793, 16
      %v1830 = vpop.permute.xlu0 %1829
      %1833 = vrot.lane.b32.xlu0 %v1779, 32
      %v1834 = vpop.permute.xlu0 %1833
      %1837 = vrot.lane.b32.xlu0 %v1795, 48
      %v1838 = vpop.permute.xlu0 %1837
      %1841 = vrot.lane.b32.xlu0 %v1787, 64
      %v1842 = vpop.permute.xlu0 %1841
      %1845 = vrot.lane.b32.xlu0 %v1797, 80
      %v1846 = vpop.permute.xlu0 %1845
      %1849 = vrot.lane.b32.xlu0 %v1791, 96
      %v1850 = vpop.permute.xlu0 %1849
      %1853 = vrot.lane.b32.xlu0 %v1799, 112
      %v1854 = vpop.permute.xlu0 %1853
      %v1856 = vsel %vm353, %v1719, %v1802
      %v1857 = vsel %vm355, %v1856, %v1806
      %v1858 = vsel %vm357, %v1857, %v1810
      %v1859 = vsel %vm359, %v1858, %v1814
      %v1860 = vsel %vm361, %v1859, %v1818
      %v1861 = vsel %vm363, %v1860, %v1822
      %v1862 = vsel %vm365, %v1861, %v1826
      %v1863 = vsel %vm353, %v1775, %v1830
      %v1864 = vsel %vm355, %v1863, %v1834
      %v1865 = vsel %vm357, %v1864, %v1838
      %v1866 = vsel %vm359, %v1865, %v1842
      %v1867 = vsel %vm361, %v1866, %v1846
      %v1868 = vsel %vm363, %v1867, %v1850
      %v1869 = vsel %vm365, %v1868, %v1854
      %v1872 = vrot.slane %v1862, 4
      %v1873 = vrot.slane %v1869, 4
      %1876 = vst [vmem:[#allocation2 + $0x30] sm:$0xf0] %v1872
      %1877 = vst [vmem:[#allocation2 + $0x38] sm:$0xf0] %v1873
      %1878 = vrot.lane.b32.xlu0 %v1454, 126
      %v1879 = vpop.permute.xlu0 %1878
      %1880 = vrot.lane.b32.xlu0 %v1456, 126
      %v1881 = vpop.permute.xlu0 %1880
      %1882 = vrot.lane.b32.xlu0 %v1459, 126
      %v1883 = vpop.permute.xlu0 %1882
      %1884 = vrot.lane.b32.xlu0 %v1461, 126
      %v1885 = vpop.permute.xlu0 %1884
      %1886 = vrot.lane.b32.xlu0 %v1464, 126
      %v1887 = vpop.permute.xlu0 %1886
      %1888 = vrot.lane.b32.xlu0 %v1466, 126
      %v1889 = vpop.permute.xlu0 %1888
      %1890 = vrot.lane.b32.xlu0 %v1469, 126
      %v1891 = vpop.permute.xlu0 %1890
      %1892 = vrot.lane.b32.xlu0 %v1471, 126
      %v1893 = vpop.permute.xlu0 %1892
      %v1902 = vrot.slane %v1887, 4
      %v1903 = vsel %vm185, %v1902, %v1879
      %v1904 = vrot.slane %v1879, 4
      %v1905 = vsel %vm185, %v1887, %v1904
      %v1907 = vunpack.c.l.s4 1983009808
      %v1908 = vunpack.c.0.s8 %v1907
      %v1909 = vperm.slane %v1903, %v1908
      %v1911 = vunpack.c.l.s4 1983009808
      %v1912 = vunpack.c.0.s8 %v1911
      %v1913 = vperm.slane %v1905, %v1912
      %v1914 = vrot.slane %v1891, 4
      %v1915 = vsel %vm185, %v1914, %v1883
      %v1916 = vrot.slane %v1883, 4
      %v1917 = vsel %vm185, %v1891, %v1916
      %v1919 = vunpack.c.l.s4 1983009808
      %v1920 = vunpack.c.0.s8 %v1919
      %v1921 = vperm.slane %v1915, %v1920
      %v1923 = vunpack.c.l.s4 1983009808
      %v1924 = vunpack.c.0.s8 %v1923
      %v1925 = vperm.slane %v1917, %v1924
      %v1926 = vrot.slane %v1921, 4
      %v1927 = vsel %vm185, %v1926, %v1909
      %v1928 = vrot.slane %v1909, 4
      %v1929 = vsel %vm185, %v1921, %v1928
      %v1931 = vunpack.c.l.s4 1934713408
      %v1932 = vunpack.c.0.s8 %v1931
      %v1933 = vperm.slane %v1927, %v1932
      %v1935 = vunpack.c.l.s4 1934713408
      %v1936 = vunpack.c.0.s8 %v1935
      %v1937 = vperm.slane %v1929, %v1936
      %v1938 = vrot.slane %v1925, 4
      %v1939 = vsel %vm185, %v1938, %v1913
      %v1940 = vrot.slane %v1913, 4
      %v1941 = vsel %vm185, %v1925, %v1940
      %v1943 = vunpack.c.l.s4 1934713408
      %v1944 = vunpack.c.0.s8 %v1943
      %v1945 = vperm.slane %v1939, %v1944
      %v1947 = vunpack.c.l.s4 1934713408
      %v1948 = vunpack.c.0.s8 %v1947
      %v1949 = vperm.slane %v1941, %v1948
      %v1950 = vrot.slane %v1933, 4
      %v1951 = vsel %vm185, 0.0, %v1950
      %v1952 = vrot.slane %v1937, 4
      %v1953 = vsel %vm185, 0.0, %v1952
      %v1954 = vrot.slane %v1945, 4
      %v1955 = vsel %vm185, 0.0, %v1954
      %v1956 = vrot.slane %v1949, 4
      %v1957 = vsel %vm185, 0.0, %v1956
      %v1958 = vrot.slane %v1889, 4
      %v1959 = vsel %vm185, %v1958, %v1881
      %v1960 = vrot.slane %v1881, 4
      %v1961 = vsel %vm185, %v1889, %v1960
      %v1963 = vunpack.c.l.s4 1983009808
      %v1964 = vunpack.c.0.s8 %v1963
      %v1965 = vperm.slane %v1959, %v1964
      %v1967 = vunpack.c.l.s4 1983009808
      %v1968 = vunpack.c.0.s8 %v1967
      %v1969 = vperm.slane %v1961, %v1968
      %v1970 = vrot.slane %v1893, 4
      %v1971 = vsel %vm185, %v1970, %v1885
      %v1972 = vrot.slane %v1885, 4
      %v1973 = vsel %vm185, %v1893, %v1972
      %v1975 = vunpack.c.l.s4 1983009808
      %v1976 = vunpack.c.0.s8 %v1975
      %v1977 = vperm.slane %v1971, %v1976
      %v1979 = vunpack.c.l.s4 1983009808
      %v1980 = vunpack.c.0.s8 %v1979
      %v1981 = vperm.slane %v1973, %v1980
      %v1982 = vrot.slane %v1977, 4
      %v1983 = vsel %vm185, %v1982, %v1965
      %v1984 = vrot.slane %v1965, 4
      %v1985 = vsel %vm185, %v1977, %v1984
      %v1987 = vunpack.c.l.s4 1934713408
      %v1988 = vunpack.c.0.s8 %v1987
      %v1989 = vperm.slane %v1983, %v1988
      %v1991 = vunpack.c.l.s4 1934713408
      %v1992 = vunpack.c.0.s8 %v1991
      %v1993 = vperm.slane %v1985, %v1992
      %v1994 = vrot.slane %v1981, 4
      %v1995 = vsel %vm185, %v1994, %v1969
      %v1996 = vrot.slane %v1969, 4
      %v1997 = vsel %vm185, %v1981, %v1996
      %v1999 = vunpack.c.l.s4 1934713408
      %v2000 = vunpack.c.0.s8 %v1999
      %v2001 = vperm.slane %v1995, %v2000
      %v2003 = vunpack.c.l.s4 1934713408
      %v2004 = vunpack.c.0.s8 %v2003
      %v2005 = vperm.slane %v1997, %v2004
      %v2006 = vrot.slane %v1989, 4
      %v2007 = vsel %vm185, 0.0, %v2006
      %v2008 = vrot.slane %v1993, 4
      %v2009 = vsel %vm185, 0.0, %v2008
      %v2010 = vrot.slane %v2001, 4
      %v2011 = vsel %vm185, 0.0, %v2010
      %v2012 = vrot.slane %v2005, 4
      %v2013 = vsel %vm185, 0.0, %v2012
      %2015 = vrot.lane.b32.xlu0 %v1951, 16
      %v2016 = vpop.permute.xlu0 %2015
      %2019 = vrot.lane.b32.xlu0 %v1937, 32
      %v2020 = vpop.permute.xlu0 %2019
      %2023 = vrot.lane.b32.xlu0 %v1953, 48
      %v2024 = vpop.permute.xlu0 %2023
      %2027 = vrot.lane.b32.xlu0 %v1945, 64
      %v2028 = vpop.permute.xlu0 %2027
      %2031 = vrot.lane.b32.xlu0 %v1955, 80
      %v2032 = vpop.permute.xlu0 %2031
      %2035 = vrot.lane.b32.xlu0 %v1949, 96
      %v2036 = vpop.permute.xlu0 %2035
      %2039 = vrot.lane.b32.xlu0 %v1957, 112
      %v2040 = vpop.permute.xlu0 %2039
      %2043 = vrot.lane.b32.xlu0 %v2007, 16
      %v2044 = vpop.permute.xlu0 %2043
      %2047 = vrot.lane.b32.xlu0 %v1993, 32
      %v2048 = vpop.permute.xlu0 %2047
      %2051 = vrot.lane.b32.xlu0 %v2009, 48
      %v2052 = vpop.permute.xlu0 %2051
      %2055 = vrot.lane.b32.xlu0 %v2001, 64
      %v2056 = vpop.permute.xlu0 %2055
      %2059 = vrot.lane.b32.xlu0 %v2011, 80
      %v2060 = vpop.permute.xlu0 %2059
      %2063 = vrot.lane.b32.xlu0 %v2005, 96
      %v2064 = vpop.permute.xlu0 %2063
      %2067 = vrot.lane.b32.xlu0 %v2013, 112
      %v2068 = vpop.permute.xlu0 %2067
      %v2070 = vsel %vm353, %v1933, %v2016
      %v2071 = vsel %vm355, %v2070, %v2020
      %v2072 = vsel %vm357, %v2071, %v2024
      %v2073 = vsel %vm359, %v2072, %v2028
      %v2074 = vsel %vm361, %v2073, %v2032
      %v2075 = vsel %vm363, %v2074, %v2036
      %v2076 = vsel %vm365, %v2075, %v2040
      %v2077 = vsel %vm353, %v1989, %v2044
      %v2078 = vsel %vm355, %v2077, %v2048
      %v2079 = vsel %vm357, %v2078, %v2052
      %v2080 = vsel %vm359, %v2079, %v2056
      %v2081 = vsel %vm361, %v2080, %v2060
      %v2082 = vsel %vm363, %v2081, %v2064
      %v2083 = vsel %vm365, %v2082, %v2068
      %2084 = vst [vmem:[#allocation2 + $0x40] sm:$0xf] %v2076
      %2085 = vst [vmem:[#allocation2 + $0x48] sm:$0xf] %v2083
      %v2086 = vld [vmem:[#allocation2] sm:$0xff]
      %v2087 = vld [vmem:[#allocation2 + $0x8] sm:$0xff]
      %v2088 = vld [vmem:[#allocation2 + $0x10] sm:$0xff]
      %v2089 = vld [vmem:[#allocation2 + $0x18] sm:$0xff]
      %v2090 = vld [vmem:[#allocation2 + $0x20] sm:$0xff]
      %v2091 = vld [vmem:[#allocation2 + $0x28] sm:$0xff]
      %v2092 = vld [vmem:[#allocation2 + $0x30] sm:$0xff]
      %v2093 = vld [vmem:[#allocation2 + $0x38] sm:$0xff]
      %v2094 = vld [vmem:[#allocation2 + $0x40] sm:$0xf]
      %v2095 = vld [vmem:[#allocation2 + $0x48] sm:$0xf]
      %v2096 = vpack.c.bf16 %v2088, %v2086
      %v2097 = vpack.c.bf16 %v2089, %v2087
      %v2098 = vpack.c.bf16 %v2092, %v2090
      %v2099 = vpack.c.bf16 %v2093, %v2091
      %v2100 = vpack.c.bf16 %v2094, %v2094
      %v2101 = vpack.c.bf16 %v2095, %v2095
      %v2102 = vld [vmem:[%s1] sm:$0xf]
      %v2103 = vld [vmem:[%s1 + $0x4] sm:$0xf]
      %v2104 = vld [vmem:[%s1 + $0x8] sm:$0x1]
      %v2105 = vld [vmem:[%s2] sm:$0xff]
      %v2106 = vld [vmem:[%s2 + $0x8] sm:$0xff]
      %v2107 = vld [vmem:[%s2 + $0x10] sm:$0x3]
      %2109 = vset.pattern.permute.xlu0 0
      %2110 = vperm.xlu0 %2109, %v2105
      %v2111 = vpop.permute.xlu0 %2110
      %2114 = vset.pattern.permute.xlu0 0
      %2115 = vperm.xlu0 %2114, %v2106
      %v2116 = vpop.permute.xlu0 %2115
      %2119 = vset.pattern.permute.xlu0 0
      %2120 = vperm.xlu0 %2119, %v2107
      %v2121 = vpop.permute.xlu0 %2120
      %v2126 = vunpack.c.l.b16 %v2102
      %v2127 = vunpack.c.l.b16 %v2103
      %v2128 = vunpack.c.l.b16 %v2104
      %v2129 = vpack.c.b16 %v2127, %v2126
      %v2130 = vpack.c.b16 %v2128, %v2128
      %vm2131 = vcmask 293888
      %v2133 = vsel %vm2131, %v2129, 0
      %v2136 = vsel %vm2131, %v2130, 0
      %vm2138 = vcmask 1041408
      %v2140 = vsel %vm2138, %v2100, 0
      %v2143 = vsel %vm2138, %v2101, 0
      %2145 = vmatpush.bf16.msra.mxu0 0
      %2146 = vmatpush.bf16.msra.mxu0 0
      %2147 = vmatpush.bf16.msra.mxu0 0
      %2148 = vmatpush.bf16.msra.mxu0 0
      %2149 = vmatpush.bf16.msra.mxu0 0
      %2150 = vmatpush.bf16.msra.mxu0 %v2140
      %2151 = vmatpush.bf16.msra.mxu0 %v2098
      %2152 = vmatpush.bf16.msra.mxu0 %v2096
      %2153 = vmatmul.bf16.gmra.mxu0 %v2133
      %v2154 = vpop.f32.mrf.mxu0
      %v2155 = vadd.f32 %v2111, %v2154
      %v2156 = vpop.f32.mrf.mxu0
      %v2157 = vadd.f32 %v2116, %v2156
      %2158 = vmatmul.bf16.gmra.mxu0 %v2136
      %v2159 = vpop.f32.mrf.mxu0
      %v2160 = vadd.f32 %v2121, %v2159
      %v2161 = vpop.f32.mrf.mxu0
      %2162 = vdwg.mxu0
      %2163 = vmatpush.bf16.msra.mxu0 0
      %2164 = vmatpush.bf16.msra.mxu0 0
      %2165 = vmatpush.bf16.msra.mxu0 0
      %2166 = vmatpush.bf16.msra.mxu0 0
      %2167 = vmatpush.bf16.msra.mxu0 0
      %2168 = vmatpush.bf16.msra.mxu0 %v2143
      %2169 = vmatpush.bf16.msra.mxu0 %v2099
      %2170 = vmatpush.bf16.msra.mxu0 %v2097
      %2171 = vmatmul.bf16.gmra.mxu0 %v2133
      %v2172 = vpop.f32.mrf.mxu0
      %v2173 = vadd.f32 %v2111, %v2172
      %v2174 = vpop.f32.mrf.mxu0
      %v2175 = vadd.f32 %v2116, %v2174
      %2176 = vmatmul.bf16.gmra.mxu0 %v2136
      %v2177 = vpop.f32.mrf.mxu0
      %v2178 = vadd.f32 %v2121, %v2177
      %v2179 = vpop.f32.mrf.mxu0
      %2180 = vdwg.mxu0
      %2181 = vst [vmem:[%s170] sm:$0xff] %v2155
      %2182 = vst [vmem:[%s170 + $0x8] sm:$0xff] %v2173
      %2183 = vst [vmem:[%s170 + $0x10] sm:$0xff] %v2157
      %2184 = vst [vmem:[%s170 + $0x18] sm:$0xff] %v2175
      %2185 = vst [vmem:[%s170 + $0x20] sm:$0x3] %v2160
      %2186 = vst [vmem:[%s170 + $0x28] sm:$0x3] %v2178
      %p2187 = scmp.lt.s32.totalorder %s14, 1
      %s2188 = scalar_select %p2187, %s14, 1
      %s2189 = smul.addr %s2188, 6
      %s2190 = smul.addr %s2189, 8
      %s2191 = scalar_lea.vmem %s3, %s2190
      // Predicated region
      $region33: #{tpu_custom_call.1} parent=31 // pred_check
        %p2192 = pneg %p100
      $region34: #{tpu_custom_call.1} parent=31 // pred_check_branch
        %2194 = sbr.rel (%p2192) target = $region36
      $region35: #{tpu_custom_call.1} parent=31 // pred_region
        _
      $region36: #{tpu_custom_call.1} parent=31 // pred_fallthru
        _
    $region32: #{tpu_custom_call.1} parent=5 // pred_fallthru
      _
    %p2195 = scmp.le.s32.totalorder 2, %s9
    // Predicated region
    $region37: #{tpu_custom_call.1} parent=5 // pred_check
      %p2196 = pneg %p2195
    $region38: #{tpu_custom_call.1} parent=5 // pred_check_branch
      %2198 = sbr.rel (%p2196) target = $region40
    $region39: #{tpu_custom_call.1} parent=5 // pred_region
      %s2199 = ssub.s32 %s9, 2
      // Predicated region
      $region41: #{tpu_custom_call.1} parent=39 // pred_check
        %p2200 = pneg %p106
      $region42: #{tpu_custom_call.1} parent=39 // pred_check_branch
        %2202 = sbr.rel (%p2200) target = $region44
      $region43: #{tpu_custom_call.1} parent=39 // pred_region
        %p2203 = scmp.lt.s32.totalorder %s15, 1
        %s2204 = scalar_select %p2203, %s15, 1
        %s2205 = smul.addr %s2204, 6
        %s2206 = smul.addr %s2205, 8
        %s2207 = scalar_lea.vmem %s3, %s2206
      $region44: #{tpu_custom_call.1} parent=39 // pred_fallthru
        _
    $region40: #{tpu_custom_call.1} parent=5 // pred_fallthru
      _
  $region6: #{tpu_custom_call.1} parent=0 // loop_footer
    %s13 = sadd.s32 1, %s9
  $region7: #{tpu_custom_call.1} parent=0 // loop_footer_branch
    %8 = sbr.rel target = $region3
  $region8: #{tpu_custom_call.1} parent=0 // loop_exit
    _

</llo_original>
